<compile_context>
chip_gen: v5e
topology: v5e:2x2
jax: 0.10.0
libtpu: 0.0.40
codegen_flags: <defaults>
</compile_context>

<pallas_src>
import functools

import numpy as np
import jax
import jax.numpy as jnp
from jax import lax
from jax.experimental import pallas as pl
from jax.experimental.pallas import tpu as pltpu

_LANE = 128      # lane-pad target. TODO(synk): consider 256-wide tiles on v6e (2x256x256 MXU).
_EPS = 1e-5


def _pad_to(n, m):
    return ((n + m - 1) // m) * m


# ---------------------------------------------------------------------------
# In-kernel helpers (traced once inside the Pallas kernel body)
# ---------------------------------------------------------------------------
def _bn_cols(y, g, b, eps):
    # Training-mode BatchNorm: batch statistics over rows (output pixels), per channel
    # column.  Folded into a single per-channel scale / bias FMA.
    mean = jnp.mean(y, axis=0, keepdims=True)                  # (1, C)
    d = y - mean
    var = jnp.mean(d * d, axis=0, keepdims=True)               # biased variance (torch)
    scale = lax.rsqrt(var + eps) * g                           # (1, C)
    return y * scale + (b - mean * scale)


def _mish(x):
    # mish(x) = x * tanh(softplus(x)) = x * (1 - 2 / ((1 + e^x)^2 + 1))
    # One exp + one approx reciprocal (EUP) instead of exp + log1p + tanh.
    t = jnp.exp(jnp.minimum(x, 20.0))          # clamp: for x > 20, mish(x) == x in f32
    u = (1.0 + t) * (1.0 + t) + 1.0
    return x * (1.0 - 2.0 * pl.reciprocal(u, approx=True))


# ---------------------------------------------------------------------------
# Pallas kernels
# ---------------------------------------------------------------------------
def _conv_bn_kernel(p_ref, w_ref, g_ref, b_ref, o_ref, *, eps):
    # Single stage: im2col patches @ weights on the MXU (bf16 in, f32 accumulate) + BN.
    y = jnp.dot(p_ref[...], w_ref[...], preferred_element_type=jnp.float32)
    o_ref[...] = _bn_cols(y, g_ref[...], b_ref[...], eps)


def _fused_downsample_kernel(p_ref, w1_ref, g1_ref, b1_ref,
                             sel_ref, w2_ref, g2_ref, b2_ref, o_ref, *, eps, taps):
    # ---- stage 1: conv1 (im2col matmul) + BN + Mish, fully VMEM-resident ----
    y1 = jnp.dot(p_ref[...], w1_ref[...], preferred_element_type=jnp.float32)   # (M1, C1p)
    a1 = _mish(_bn_cols(y1, g1_ref[...], b1_ref[...], eps)).astype(jnp.bfloat16)

    # ---- stage 2: conv2 (3x3, stride 2, pad 1) as `taps` selection matmuls ----
    # sel_ref[t] is a 0/1 row-selection matrix implementing the strided spatial gather
    # (zero rows encode the spatial zero-padding), so the whole gather runs on the MXU.
    m2, c2p = o_ref.shape
    acc = jnp.zeros((m2, c2p), jnp.float32)
    for t in range(taps):                                      # static unroll (9 taps)
        gathered = jnp.dot(sel_ref[t], a1, preferred_element_type=jnp.float32)  # (M2, C1p)
        acc = acc + jnp.dot(gathered.astype(jnp.bfloat16), w2_ref[t],
                            preferred_element_type=jnp.float32)
    o_ref[...] = _bn_cols(acc, g2_ref[...], b2_ref[...], eps)


# ---------------------------------------------------------------------------
# pallas_call wrappers
# ---------------------------------------------------------------------------
_CPARAMS = pltpu.CompilerParams(dimension_semantics=("arbitrary",),
                                vmem_limit_bytes=32 * 1024 * 1024)


def fused_conv_bn(patches, w2d, gamma, beta, *, eps=_EPS):
    M, K = patches.shape
    C = w2d.shape[1]
    cost = pl.CostEstimate(flops=2 * M * K * C, transcendentals=M * C,
                           bytes_accessed=2 * (M * K + K * C) + 4 * (2 * C + M * C))
    return pl.pallas_call(
        functools.partial(_conv_bn_kernel, eps=eps),
        out_shape=jax.ShapeDtypeStruct((M, C), jnp.float32),
        grid=(1,),
        in_specs=[
            pl.BlockSpec((M, K), lambda i: (0, 0)),
            pl.BlockSpec((K, C), lambda i: (0, 0)),
            pl.BlockSpec((1, C), lambda i: (0, 0)),
            pl.BlockSpec((1, C), lambda i: (0, 0)),
        ],
        out_specs=pl.BlockSpec((M, C), lambda i: (0, 0)),
        compiler_params=_CPARAMS,
        cost_estimate=cost,
    )(patches, w2d, gamma, beta)


def fused_downsample(patches, w1, g1, b1, sel, w2t, g2, b2, *, eps=_EPS):
    M1, K1 = patches.shape
    C1 = w1.shape[1]
    T, M2, _ = sel.shape
    C2 = w2t.shape[2]
    flops = 2 * M1 * K1 * C1 + T * (2 * M2 * M1 * C1 + 2 * M2 * C1 * C2)
    bytes_accessed = (2 * (M1 * K1 + K1 * C1 + T * M2 * M1 + T * C1 * C2)
                      + 4 * (2 * C1 + 2 * C2 + M2 * C2))
    cost = pl.CostEstimate(flops=flops, transcendentals=2 * M1 * C1 + M1 * C1 + M2 * C2,
                           bytes_accessed=bytes_accessed)
    return pl.pallas_call(
        functools.partial(_fused_downsample_kernel, eps=eps, taps=T),
        out_shape=jax.ShapeDtypeStruct((M2, C2), jnp.float32),
        grid=(1,),
        in_specs=[
            pl.BlockSpec((M1, K1), lambda i: (0, 0)),
            pl.BlockSpec((K1, C1), lambda i: (0, 0)),
            pl.BlockSpec((1, C1), lambda i: (0, 0)),
            pl.BlockSpec((1, C1), lambda i: (0, 0)),
            pl.BlockSpec((T, M2, M1), lambda i: (0, 0, 0)),
            pl.BlockSpec((T, C1, C2), lambda i: (0, 0, 0)),
            pl.BlockSpec((1, C2), lambda i: (0, 0)),
            pl.BlockSpec((1, C2), lambda i: (0, 0)),
        ],
        out_specs=pl.BlockSpec((M2, C2), lambda i: (0, 0)),
        compiler_params=_CPARAMS,
        cost_estimate=cost,
    )(patches, w1, g1, b1, sel, w2t, g2, b2)


# ---------------------------------------------------------------------------
# Wrapper-side plumbing (channel-last / NHWC, lane-padded)
# ---------------------------------------------------------------------------
def _im2col_nhwc(x, kh, kw, stride, pad):
    # x: (N, H, W, C) -> (N*Ho*Wo, kh*kw*C) channel-last patches (lane-contiguous).
    N, H, W, C = x.shape
    xp = jnp.pad(x, ((0, 0), (pad, pad), (pad, pad), (0, 0)))
    Ho = (H + 2 * pad - kh) // stride + 1
    Wo = (W + 2 * pad - kw) // stride + 1
    cols = []
    for i in range(kh):
        for j in range(kw):
            cols.append(xp[:, i:i + stride * Ho:stride, j:j + stride * Wo:stride, :])
    p = jnp.concatenate(cols, axis=-1)                     # (N, Ho, Wo, kh*kw*C)
    return p.reshape(N * Ho * Wo, kh * kw * C), Ho, Wo


def _flatten_w1(w, kpad, cpad):
    # OIHW (C, Cin, kh, kw) -> (kh*kw*Cin, C), zero-padded to (kpad, cpad).
    C, Cin, kh, kw = w.shape
    w2d = jnp.transpose(w, (2, 3, 1, 0)).reshape(kh * kw * Cin, C)
    return jnp.pad(w2d, ((0, kpad - kh * kw * Cin), (0, cpad - C)))


def _flatten_w2_taps(w, cin_pad, cout_pad):
    # OIHW (C2, C1, kh, kw) -> (kh*kw, C1p, C2p), one (Cin, Cout) slab per spatial tap.
    C2, C1, kh, kw = w.shape
    wt = jnp.transpose(w, (2, 3, 1, 0)).reshape(kh * kw, C1, C2)
    return jnp.pad(wt, ((0, 0), (0, cin_pad - C1), (0, cout_pad - C2)))


def _pad_gb(g, b, cpad):
    # gamma padded with ones, beta with zeros -> padded channels stay exactly zero.
    C = g.shape[0]
    gp = jnp.concatenate([g, jnp.ones((cpad - C,), g.dtype)]).reshape(1, cpad)
    bp = jnp.pad(b, (0, cpad - C)).reshape(1, cpad)
    return gp, bp


def _build_selection(N, Ho1, Wo1, Ho2, Wo2, k, stride, pad):
    # Per-tap 0/1 row-selection matrices implementing the stride-2 3x3 spatial gather.
    M1, M2 = N * Ho1 * Wo1, N * Ho2 * Wo2
    S = np.zeros((k * k, M2, M1), np.float32)
    for n in range(N):
        for ho in range(Ho2):
            for wo in range(Wo2):
                m2 = (n * Ho2 + ho) * Wo2 + wo
                for i in range(k):
                    for j in range(k):
                        h = stride * ho - pad + i
                        w = stride * wo - pad + j
                        if 0 <= h < Ho1 and 0 <= w < Wo1:
                            S[i * k + j, m2, (n * Ho1 + h) * Wo1 + w] = 1.0
    return S


# ---------------------------------------------------------------------------
# Downsample.forward equivalent
# ---------------------------------------------------------------------------
def downsample_forward(x_list, params, *, kernel_size, stride, padding, extra_layers):
    x0, x1, x2 = x_list
    x_nhwc = jnp.transpose(x0.astype(jnp.float32), (0, 2, 3, 1))   # single NCHW->NHWC pass
    N = x_nhwc.shape[0]

    w1 = params["conv_w"]                                          # (C1, Cin, kh, kw)
    C1 = w1.shape[0]
    C1p = _pad_to(max(C1, _LANE), _LANE)

    p1, Ho1, Wo1 = _im2col_nhwc(x_nhwc, kernel_size, kernel_size, stride, padding)
    K1 = p1.shape[1]
    K1p = _pad_to(max(K1, _LANE), _LANE)
    p1 = jnp.pad(p1, ((0, 0), (0, K1p - K1))).astype(jnp.bfloat16)
    w1p = _flatten_w1(w1, K1p, C1p).astype(jnp.bfloat16)
    g1, b1 = _pad_gb(params["bn_g"], params["bn_b"], C1p)

    if not extra_layers:
        out = fused_conv_bn(p1, w1p, g1, b1)
        out = out[:, :C1].reshape(N, Ho1, Wo1, C1)
        return [jnp.transpose(out, (0, 3, 1, 2)), x1, x2]

    w2 = params["conv_extra_w"]                                    # (C2, C1, 3, 3)
    C2 = w2.shape[0]
    C2p = _pad_to(max(C2, _LANE), _LANE)
    Ho2 = (Ho1 + 2 * 1 - 3) // 2 + 1
    Wo2 = (Wo1 + 2 * 1 - 3) // 2 + 1

    sel = jnp.asarray(_build_selection(N, Ho1, Wo1, Ho2, Wo2, 3, 2, 1), jnp.bfloat16)
    w2t = _flatten_w2_taps(w2, C1p, C2p).astype(jnp.bfloat16)
    g2, b2 = _pad_gb(params["bn_extra_g"], params["bn_extra_b"], C2p)

    out = fused_downsample(p1, w1p, g1, b1, sel, w2t, g2, b2)      # one pallas_call total
    out = out[:, :C2].reshape(N, Ho2, Wo2, C2)
    return [jnp.transpose(out, (0, 3, 1, 2)), x1, x2]


# ---------------------------------------------------------------------------
# Pure-JAX reference (faithful f32 conv + training-mode BN + exact Mish)
# ---------------------------------------------------------------------------
def _bn_train_ref(y, g, b, eps=_EPS):
    mean = y.mean(axis=(0, 2, 3), keepdims=True)
    var = ((y - mean) ** 2).mean(axis=(0, 2, 3), keepdims=True)
    return (y - mean) * lax.rsqrt(var + eps) * g.reshape(1, -1, 1, 1) + b.reshape(1, -1, 1, 1)


def ref_forward(x0, params, *, kernel_size, stride, padding, extra_layers):
    del kernel_size
    y = lax.conv_general_dilated(
        x0, params["conv_w"], (stride, stride), [(padding, padding)] * 2,
        dimension_numbers=("NCHW", "OIHW", "NCHW"), precision=lax.Precision.HIGHEST)
    y = _bn_train_ref(y, params["bn_g"], params["bn_b"])
    if extra_layers:
        sp = jnp.maximum(y, 0.0) + jnp.log1p(jnp.exp(-jnp.abs(y)))
        y = y * jnp.tanh(sp)
        y = lax.conv_general_dilated(
            y, params["conv_extra_w"], (2, 2), [(1, 1), (1, 1)],
            dimension_numbers=("NCHW", "OIHW", "NCHW"), precision=lax.Precision.HIGHEST)
        y = _bn_train_ref(y, params["bn_extra_g"], params["bn_extra_b"])
    return y


if __name__ == "__main__":
    # Module config: Downsample(in_channels=4, channels=8, kernel_size=3,
    #                           stride=2, padding=1, extra_layers=True)
    in_channels, channels = 4, 8
    kernel_size, stride, padding = 3, 2, 1
    extra_layers = True

    key = jax.random.PRNGKey(0)
    k0, k1, k2, k3, k4 = jax.random.split(key, 5)

    params = {
        "conv_w": jax.random.normal(k1, (channels, in_channels, kernel_size, kernel_size),
                                    jnp.float32) * 0.1,
        "bn_g": jnp.ones((channels,), jnp.float32),
        "bn_b": jnp.zeros((channels,), jnp.float32),
        "conv_extra_w": jax.random.normal(k2, (channels * 2, channels, 3, 3),
                                          jnp.float32) * 0.1,
        "bn_extra_g": jnp.ones((channels * 2,), jnp.float32),
        "bn_extra_b": jnp.zeros((channels * 2,), jnp.float32),
    }

    x0 = jax.random.normal(k0, (2, in_channels, 16, 16), jnp.float32)
    x1 = jax.random.normal(k3, (2, in_channels, 8, 8), jnp.float32)
    x2 = jax.random.normal(k4, (2, in_channels, 4, 4), jnp.float32)

    out_list = downsample_forward(
        [x0, x1, x2], params,
        kernel_size=kernel_size, stride=stride, padding=padding,
        extra_layers=extra_layers)
    out = jax.block_until_ready(out_list[0])

    ref = jax.block_until_ready(ref_forward(
        x0, params, kernel_size=kernel_size, stride=stride, padding=padding,
        extra_layers=extra_layers))

    assert out.shape == (2, channels * 2, 4, 4), out.shape
    # Tolerance accounts for single-pass bf16 MXU inputs + approx reciprocal in Mish
    # (reference uses f32 HIGHEST-precision convolutions).
    assert jnp.allclose(out, ref, atol=5e-2, rtol=5e-2), float(jnp.abs(out - ref).max())
    assert jnp.array_equal(out_list[1], x1) and jnp.array_equal(out_list[2], x2)

    print("KERNEL_OK")
</pallas_src>

<mosaic_0001>
module attributes {stable_mosaic.version = 11 : i64} {
  func.func @_fused_downsample_kernel(%arg0: i32, %arg1: memref<128x128xbf16, #tpu.memory_space<vmem>>, %arg2: memref<128x128xbf16, #tpu.memory_space<vmem>>, %arg3: memref<1x128xf32, #tpu.memory_space<vmem>>, %arg4: memref<1x128xf32, #tpu.memory_space<vmem>>, %arg5: memref<9x32x128xbf16, #tpu.memory_space<vmem>>, %arg6: memref<9x128x128xbf16, #tpu.memory_space<vmem>>, %arg7: memref<1x128xf32, #tpu.memory_space<vmem>>, %arg8: memref<1x128xf32, #tpu.memory_space<vmem>>, %arg9: memref<32x128xf32, #tpu.memory_space<vmem>>) attributes {dimension_semantics = [#tpu.dimension_semantics<arbitrary>], iteration_bounds = array<i64: 1>, scalar_prefetch = 0 : i64, scratch_operands = 0 : i64, tpu.core_type = #tpu.core_type<tc>, window_params = [{pipeline_mode = #tpu.pipeline_mode<synchronous>, transform_indices = @transform_0, window_bounds = array<i64: 128, 128>}, {pipeline_mode = #tpu.pipeline_mode<synchronous>, transform_indices = @transform_1, window_bounds = array<i64: 128, 128>}, {pipeline_mode = #tpu.pipeline_mode<synchronous>, transform_indices = @transform_2, window_bounds = array<i64: 1, 128>}, {pipeline_mode = #tpu.pipeline_mode<synchronous>, transform_indices = @transform_3, window_bounds = array<i64: 1, 128>}, {pipeline_mode = #tpu.pipeline_mode<synchronous>, transform_indices = @transform_4, window_bounds = array<i64: 9, 32, 128>}, {pipeline_mode = #tpu.pipeline_mode<synchronous>, transform_indices = @transform_5, window_bounds = array<i64: 9, 128, 128>}, {pipeline_mode = #tpu.pipeline_mode<synchronous>, transform_indices = @transform_6, window_bounds = array<i64: 1, 128>}, {pipeline_mode = #tpu.pipeline_mode<synchronous>, transform_indices = @transform_7, window_bounds = array<i64: 1, 128>}, {pipeline_mode = #tpu.pipeline_mode<synchronous>, transform_indices = @transform_8, window_bounds = array<i64: 32, 128>}]} {
    %c0 = arith.constant 0 : index
    %c0_0 = arith.constant 0 : index
    %0 = vector.load %arg1[%c0, %c0_0] : memref<128x128xbf16, #tpu.memory_space<vmem>>, vector<128x128xbf16>
    %c0_1 = arith.constant 0 : index
    %c0_2 = arith.constant 0 : index
    %1 = vector.load %arg2[%c0_1, %c0_2] : memref<128x128xbf16, #tpu.memory_space<vmem>>, vector<128x128xbf16>
    %cst = arith.constant dense<0.000000e+00> : vector<128x128xf32>
    %2 = tpu.matmul %0, %1, %cst {dimension_numbers = #tpu.dot_dimension_numbers<[1], [0], [0], [1], [0, 0, 1, 1], [], []>} : vector<128x128xbf16>, vector<128x128xbf16>, vector<128x128xf32> -> vector<128x128xf32>
    %c0_3 = arith.constant 0 : index
    %c0_4 = arith.constant 0 : index
    %3 = vector.load %arg3[%c0_3, %c0_4] : memref<1x128xf32, #tpu.memory_space<vmem>>, vector<1x128xf32>
    %c0_5 = arith.constant 0 : index
    %c0_6 = arith.constant 0 : index
    %4 = vector.load %arg4[%c0_5, %c0_6] : memref<1x128xf32, #tpu.memory_space<vmem>>, vector<1x128xf32>
    %cst_7 = arith.constant dense<0.000000e+00> : vector<128xf32>
    %5 = vector.multi_reduction <add>, %2, %cst_7 [0] : vector<128x128xf32> to vector<128xf32>
    %6 = vector.shape_cast %5 : vector<128xf32> to vector<1x128xf32>
    %cst_8 = arith.constant 1.280000e+02 : f32
    %7 = vector.broadcast %cst_8 : f32 to vector<1x128xf32>
    %8 = arith.divf %6, %7 : vector<1x128xf32>
    %9 = vector.broadcast %8 : vector<1x128xf32> to vector<128x128xf32>
    %10 = arith.subf %2, %9 : vector<128x128xf32>
    %11 = arith.mulf %10, %10 : vector<128x128xf32>
    %cst_9 = arith.constant dense<0.000000e+00> : vector<128xf32>
    %12 = vector.multi_reduction <add>, %11, %cst_9 [0] : vector<128x128xf32> to vector<128xf32>
    %13 = vector.shape_cast %12 : vector<128xf32> to vector<1x128xf32>
    %cst_10 = arith.constant 1.280000e+02 : f32
    %14 = vector.broadcast %cst_10 : f32 to vector<1x128xf32>
    %15 = arith.divf %13, %14 : vector<1x128xf32>
    %cst_11 = arith.constant 9.99999974E-6 : f32
    %16 = vector.broadcast %cst_11 : f32 to vector<1x128xf32>
    %17 = arith.addf %15, %16 : vector<1x128xf32>
    %18 = math.rsqrt %17 : vector<1x128xf32>
    %19 = arith.mulf %18, %3 : vector<1x128xf32>
    %20 = vector.broadcast %19 : vector<1x128xf32> to vector<128x128xf32>
    %21 = arith.mulf %2, %20 : vector<128x128xf32>
    %22 = arith.mulf %8, %19 : vector<1x128xf32>
    %23 = arith.subf %4, %22 : vector<1x128xf32>
    %24 = vector.broadcast %23 : vector<1x128xf32> to vector<128x128xf32>
    %25 = arith.addf %21, %24 : vector<128x128xf32>
    %cst_12 = arith.constant 2.000000e+01 : f32
    %26 = vector.broadcast %cst_12 : f32 to vector<128x128xf32>
    %27 = arith.minimumf %25, %26 : vector<128x128xf32>
    %28 = math.exp %27 : vector<128x128xf32>
    %cst_13 = arith.constant 1.000000e+00 : f32
    %29 = vector.broadcast %cst_13 : f32 to vector<128x128xf32>
    %30 = arith.addf %29, %28 : vector<128x128xf32>
    %cst_14 = arith.constant 1.000000e+00 : f32
    %31 = vector.broadcast %cst_14 : f32 to vector<128x128xf32>
    %32 = arith.addf %31, %28 : vector<128x128xf32>
    %33 = arith.mulf %30, %32 : vector<128x128xf32>
    %cst_15 = arith.constant 1.000000e+00 : f32
    %34 = vector.broadcast %cst_15 : f32 to vector<128x128xf32>
    %35 = arith.addf %33, %34 : vector<128x128xf32>
    %36 = tpu.reciprocal %35 {approx = true} : vector<128x128xf32> -> vector<128x128xf32>
    %cst_16 = arith.constant 2.000000e+00 : f32
    %37 = vector.broadcast %cst_16 : f32 to vector<128x128xf32>
    %38 = arith.mulf %37, %36 : vector<128x128xf32>
    %cst_17 = arith.constant 1.000000e+00 : f32
    %39 = vector.broadcast %cst_17 : f32 to vector<128x128xf32>
    %40 = arith.subf %39, %38 : vector<128x128xf32>
    %41 = arith.mulf %25, %40 : vector<128x128xf32>
    %42 = arith.truncf %41 : vector<128x128xf32> to vector<128x128xbf16>
    %cst_18 = arith.constant 0.000000e+00 : f32
    %43 = vector.broadcast %cst_18 : f32 to vector<32x128xf32>
    %c0_19 = arith.constant 0 : index
    %c0_20 = arith.constant 0 : index
    %c0_21 = arith.constant 0 : index
    %44 = vector.load %arg5[%c0_19, %c0_20, %c0_21] : memref<9x32x128xbf16, #tpu.memory_space<vmem>>, vector<1x32x128xbf16>
    %45 = vector.shape_cast %44 : vector<1x32x128xbf16> to vector<32x128xbf16>
    %cst_22 = arith.constant dense<0.000000e+00> : vector<32x128xf32>
    %46 = tpu.matmul %45, %42, %cst_22 {dimension_numbers = #tpu.dot_dimension_numbers<[1], [0], [0], [1], [0, 0, 1, 1], [], []>} : vector<32x128xbf16>, vector<128x128xbf16>, vector<32x128xf32> -> vector<32x128xf32>
    %47 = arith.truncf %46 : vector<32x128xf32> to vector<32x128xbf16>
    %c0_23 = arith.constant 0 : index
    %c0_24 = arith.constant 0 : index
    %c0_25 = arith.constant 0 : index
    %48 = vector.load %arg6[%c0_23, %c0_24, %c0_25] : memref<9x128x128xbf16, #tpu.memory_space<vmem>>, vector<1x128x128xbf16>
    %49 = vector.shape_cast %48 : vector<1x128x128xbf16> to vector<128x128xbf16>
    %cst_26 = arith.constant dense<0.000000e+00> : vector<32x128xf32>
    %50 = tpu.matmul %47, %49, %cst_26 {dimension_numbers = #tpu.dot_dimension_numbers<[1], [0], [0], [1], [0, 0, 1, 1], [], []>} : vector<32x128xbf16>, vector<128x128xbf16>, vector<32x128xf32> -> vector<32x128xf32>
    %51 = arith.addf %43, %50 : vector<32x128xf32>
    %c1 = arith.constant 1 : index
    %c0_27 = arith.constant 0 : index
    %c0_28 = arith.constant 0 : index
    %52 = vector.load %arg5[%c1, %c0_27, %c0_28] : memref<9x32x128xbf16, #tpu.memory_space<vmem>>, vector<1x32x128xbf16>
    %53 = vector.shape_cast %52 : vector<1x32x128xbf16> to vector<32x128xbf16>
    %cst_29 = arith.constant dense<0.000000e+00> : vector<32x128xf32>
    %54 = tpu.matmul %53, %42, %cst_29 {dimension_numbers = #tpu.dot_dimension_numbers<[1], [0], [0], [1], [0, 0, 1, 1], [], []>} : vector<32x128xbf16>, vector<128x128xbf16>, vector<32x128xf32> -> vector<32x128xf32>
    %55 = arith.truncf %54 : vector<32x128xf32> to vector<32x128xbf16>
    %c1_30 = arith.constant 1 : index
    %c0_31 = arith.constant 0 : index
    %c0_32 = arith.constant 0 : index
    %56 = vector.load %arg6[%c1_30, %c0_31, %c0_32] : memref<9x128x128xbf16, #tpu.memory_space<vmem>>, vector<1x128x128xbf16>
    %57 = vector.shape_cast %56 : vector<1x128x128xbf16> to vector<128x128xbf16>
    %cst_33 = arith.constant dense<0.000000e+00> : vector<32x128xf32>
    %58 = tpu.matmul %55, %57, %cst_33 {dimension_numbers = #tpu.dot_dimension_numbers<[1], [0], [0], [1], [0, 0, 1, 1], [], []>} : vector<32x128xbf16>, vector<128x128xbf16>, vector<32x128xf32> -> vector<32x128xf32>
    %59 = arith.addf %51, %58 : vector<32x128xf32>
    %c2 = arith.constant 2 : index
    %c0_34 = arith.constant 0 : index
    %c0_35 = arith.constant 0 : index
    %60 = vector.load %arg5[%c2, %c0_34, %c0_35] : memref<9x32x128xbf16, #tpu.memory_space<vmem>>, vector<1x32x128xbf16>
    %61 = vector.shape_cast %60 : vector<1x32x128xbf16> to vector<32x128xbf16>
    %cst_36 = arith.constant dense<0.000000e+00> : vector<32x128xf32>
    %62 = tpu.matmul %61, %42, %cst_36 {dimension_numbers = #tpu.dot_dimension_numbers<[1], [0], [0], [1], [0, 0, 1, 1], [], []>} : vector<32x128xbf16>, vector<128x128xbf16>, vector<32x128xf32> -> vector<32x128xf32>
    %63 = arith.truncf %62 : vector<32x128xf32> to vector<32x128xbf16>
    %c2_37 = arith.constant 2 : index
    %c0_38 = arith.constant 0 : index
    %c0_39 = arith.constant 0 : index
    %64 = vector.load %arg6[%c2_37, %c0_38, %c0_39] : memref<9x128x128xbf16, #tpu.memory_space<vmem>>, vector<1x128x128xbf16>
    %65 = vector.shape_cast %64 : vector<1x128x128xbf16> to vector<128x128xbf16>
    %cst_40 = arith.constant dense<0.000000e+00> : vector<32x128xf32>
    %66 = tpu.matmul %63, %65, %cst_40 {dimension_numbers = #tpu.dot_dimension_numbers<[1], [0], [0], [1], [0, 0, 1, 1], [], []>} : vector<32x128xbf16>, vector<128x128xbf16>, vector<32x128xf32> -> vector<32x128xf32>
    %67 = arith.addf %59, %66 : vector<32x128xf32>
    %c3 = arith.constant 3 : index
    %c0_41 = arith.constant 0 : index
    %c0_42 = arith.constant 0 : index
    %68 = vector.load %arg5[%c3, %c0_41, %c0_42] : memref<9x32x128xbf16, #tpu.memory_space<vmem>>, vector<1x32x128xbf16>
    %69 = vector.shape_cast %68 : vector<1x32x128xbf16> to vector<32x128xbf16>
    %cst_43 = arith.constant dense<0.000000e+00> : vector<32x128xf32>
    %70 = tpu.matmul %69, %42, %cst_43 {dimension_numbers = #tpu.dot_dimension_numbers<[1], [0], [0], [1], [0, 0, 1, 1], [], []>} : vector<32x128xbf16>, vector<128x128xbf16>, vector<32x128xf32> -> vector<32x128xf32>
    %71 = arith.truncf %70 : vector<32x128xf32> to vector<32x128xbf16>
    %c3_44 = arith.constant 3 : index
    %c0_45 = arith.constant 0 : index
    %c0_46 = arith.constant 0 : index
    %72 = vector.load %arg6[%c3_44, %c0_45, %c0_46] : memref<9x128x128xbf16, #tpu.memory_space<vmem>>, vector<1x128x128xbf16>
    %73 = vector.shape_cast %72 : vector<1x128x128xbf16> to vector<128x128xbf16>
    %cst_47 = arith.constant dense<0.000000e+00> : vector<32x128xf32>
    %74 = tpu.matmul %71, %73, %cst_47 {dimension_numbers = #tpu.dot_dimension_numbers<[1], [0], [0], [1], [0, 0, 1, 1], [], []>} : vector<32x128xbf16>, vector<128x128xbf16>, vector<32x128xf32> -> vector<32x128xf32>
    %75 = arith.addf %67, %74 : vector<32x128xf32>
    %c4 = arith.constant 4 : index
    %c0_48 = arith.constant 0 : index
    %c0_49 = arith.constant 0 : index
    %76 = vector.load %arg5[%c4, %c0_48, %c0_49] : memref<9x32x128xbf16, #tpu.memory_space<vmem>>, vector<1x32x128xbf16>
    %77 = vector.shape_cast %76 : vector<1x32x128xbf16> to vector<32x128xbf16>
    %cst_50 = arith.constant dense<0.000000e+00> : vector<32x128xf32>
    %78 = tpu.matmul %77, %42, %cst_50 {dimension_numbers = #tpu.dot_dimension_numbers<[1], [0], [0], [1], [0, 0, 1, 1], [], []>} : vector<32x128xbf16>, vector<128x128xbf16>, vector<32x128xf32> -> vector<32x128xf32>
    %79 = arith.truncf %78 : vector<32x128xf32> to vector<32x128xbf16>
    %c4_51 = arith.constant 4 : index
    %c0_52 = arith.constant 0 : index
    %c0_53 = arith.constant 0 : index
    %80 = vector.load %arg6[%c4_51, %c0_52, %c0_53] : memref<9x128x128xbf16, #tpu.memory_space<vmem>>, vector<1x128x128xbf16>
    %81 = vector.shape_cast %80 : vector<1x128x128xbf16> to vector<128x128xbf16>
    %cst_54 = arith.constant dense<0.000000e+00> : vector<32x128xf32>
    %82 = tpu.matmul %79, %81, %cst_54 {dimension_numbers = #tpu.dot_dimension_numbers<[1], [0], [0], [1], [0, 0, 1, 1], [], []>} : vector<32x128xbf16>, vector<128x128xbf16>, vector<32x128xf32> -> vector<32x128xf32>
    %83 = arith.addf %75, %82 : vector<32x128xf32>
    %c5 = arith.constant 5 : index
    %c0_55 = arith.constant 0 : index
    %c0_56 = arith.constant 0 : index
    %84 = vector.load %arg5[%c5, %c0_55, %c0_56] : memref<9x32x128xbf16, #tpu.memory_space<vmem>>, vector<1x32x128xbf16>
    %85 = vector.shape_cast %84 : vector<1x32x128xbf16> to vector<32x128xbf16>
    %cst_57 = arith.constant dense<0.000000e+00> : vector<32x128xf32>
    %86 = tpu.matmul %85, %42, %cst_57 {dimension_numbers = #tpu.dot_dimension_numbers<[1], [0], [0], [1], [0, 0, 1, 1], [], []>} : vector<32x128xbf16>, vector<128x128xbf16>, vector<32x128xf32> -> vector<32x128xf32>
    %87 = arith.truncf %86 : vector<32x128xf32> to vector<32x128xbf16>
    %c5_58 = arith.constant 5 : index
    %c0_59 = arith.constant 0 : index
    %c0_60 = arith.constant 0 : index
    %88 = vector.load %arg6[%c5_58, %c0_59, %c0_60] : memref<9x128x128xbf16, #tpu.memory_space<vmem>>, vector<1x128x128xbf16>
    %89 = vector.shape_cast %88 : vector<1x128x128xbf16> to vector<128x128xbf16>
    %cst_61 = arith.constant dense<0.000000e+00> : vector<32x128xf32>
    %90 = tpu.matmul %87, %89, %cst_61 {dimension_numbers = #tpu.dot_dimension_numbers<[1], [0], [0], [1], [0, 0, 1, 1], [], []>} : vector<32x128xbf16>, vector<128x128xbf16>, vector<32x128xf32> -> vector<32x128xf32>
    %91 = arith.addf %83, %90 : vector<32x128xf32>
    %c6 = arith.constant 6 : index
    %c0_62 = arith.constant 0 : index
    %c0_63 = arith.constant 0 : index
    %92 = vector.load %arg5[%c6, %c0_62, %c0_63] : memref<9x32x128xbf16, #tpu.memory_space<vmem>>, vector<1x32x128xbf16>
    %93 = vector.shape_cast %92 : vector<1x32x128xbf16> to vector<32x128xbf16>
    %cst_64 = arith.constant dense<0.000000e+00> : vector<32x128xf32>
    %94 = tpu.matmul %93, %42, %cst_64 {dimension_numbers = #tpu.dot_dimension_numbers<[1], [0], [0], [1], [0, 0, 1, 1], [], []>} : vector<32x128xbf16>, vector<128x128xbf16>, vector<32x128xf32> -> vector<32x128xf32>
    %95 = arith.truncf %94 : vector<32x128xf32> to vector<32x128xbf16>
    %c6_65 = arith.constant 6 : index
    %c0_66 = arith.constant 0 : index
    %c0_67 = arith.constant 0 : index
    %96 = vector.load %arg6[%c6_65, %c0_66, %c0_67] : memref<9x128x128xbf16, #tpu.memory_space<vmem>>, vector<1x128x128xbf16>
    %97 = vector.shape_cast %96 : vector<1x128x128xbf16> to vector<128x128xbf16>
    %cst_68 = arith.constant dense<0.000000e+00> : vector<32x128xf32>
    %98 = tpu.matmul %95, %97, %cst_68 {dimension_numbers = #tpu.dot_dimension_numbers<[1], [0], [0], [1], [0, 0, 1, 1], [], []>} : vector<32x128xbf16>, vector<128x128xbf16>, vector<32x128xf32> -> vector<32x128xf32>
    %99 = arith.addf %91, %98 : vector<32x128xf32>
    %c7 = arith.constant 7 : index
    %c0_69 = arith.constant 0 : index
    %c0_70 = arith.constant 0 : index
    %100 = vector.load %arg5[%c7, %c0_69, %c0_70] : memref<9x32x128xbf16, #tpu.memory_space<vmem>>, vector<1x32x128xbf16>
    %101 = vector.shape_cast %100 : vector<1x32x128xbf16> to vector<32x128xbf16>
    %cst_71 = arith.constant dense<0.000000e+00> : vector<32x128xf32>
    %102 = tpu.matmul %101, %42, %cst_71 {dimension_numbers = #tpu.dot_dimension_numbers<[1], [0], [0], [1], [0, 0, 1, 1], [], []>} : vector<32x128xbf16>, vector<128x128xbf16>, vector<32x128xf32> -> vector<32x128xf32>
    %103 = arith.truncf %102 : vector<32x128xf32> to vector<32x128xbf16>
    %c7_72 = arith.constant 7 : index
    %c0_73 = arith.constant 0 : index
    %c0_74 = arith.constant 0 : index
    %104 = vector.load %arg6[%c7_72, %c0_73, %c0_74] : memref<9x128x128xbf16, #tpu.memory_space<vmem>>, vector<1x128x128xbf16>
    %105 = vector.shape_cast %104 : vector<1x128x128xbf16> to vector<128x128xbf16>
    %cst_75 = arith.constant dense<0.000000e+00> : vector<32x128xf32>
    %106 = tpu.matmul %103, %105, %cst_75 {dimension_numbers = #tpu.dot_dimension_numbers<[1], [0], [0], [1], [0, 0, 1, 1], [], []>} : vector<32x128xbf16>, vector<128x128xbf16>, vector<32x128xf32> -> vector<32x128xf32>
    %107 = arith.addf %99, %106 : vector<32x128xf32>
    %c8 = arith.constant 8 : index
    %c0_76 = arith.constant 0 : index
    %c0_77 = arith.constant 0 : index
    %108 = vector.load %arg5[%c8, %c0_76, %c0_77] : memref<9x32x128xbf16, #tpu.memory_space<vmem>>, vector<1x32x128xbf16>
    %109 = vector.shape_cast %108 : vector<1x32x128xbf16> to vector<32x128xbf16>
    %cst_78 = arith.constant dense<0.000000e+00> : vector<32x128xf32>
    %110 = tpu.matmul %109, %42, %cst_78 {dimension_numbers = #tpu.dot_dimension_numbers<[1], [0], [0], [1], [0, 0, 1, 1], [], []>} : vector<32x128xbf16>, vector<128x128xbf16>, vector<32x128xf32> -> vector<32x128xf32>
    %111 = arith.truncf %110 : vector<32x128xf32> to vector<32x128xbf16>
    %c8_79 = arith.constant 8 : index
    %c0_80 = arith.constant 0 : index
    %c0_81 = arith.constant 0 : index
    %112 = vector.load %arg6[%c8_79, %c0_80, %c0_81] : memref<9x128x128xbf16, #tpu.memory_space<vmem>>, vector<1x128x128xbf16>
    %113 = vector.shape_cast %112 : vector<1x128x128xbf16> to vector<128x128xbf16>
    %cst_82 = arith.constant dense<0.000000e+00> : vector<32x128xf32>
    %114 = tpu.matmul %111, %113, %cst_82 {dimension_numbers = #tpu.dot_dimension_numbers<[1], [0], [0], [1], [0, 0, 1, 1], [], []>} : vector<32x128xbf16>, vector<128x128xbf16>, vector<32x128xf32> -> vector<32x128xf32>
    %115 = arith.addf %107, %114 : vector<32x128xf32>
    %c0_83 = arith.constant 0 : index
    %c0_84 = arith.constant 0 : index
    %116 = vector.load %arg7[%c0_83, %c0_84] : memref<1x128xf32, #tpu.memory_space<vmem>>, vector<1x128xf32>
    %c0_85 = arith.constant 0 : index
    %c0_86 = arith.constant 0 : index
    %117 = vector.load %arg8[%c0_85, %c0_86] : memref<1x128xf32, #tpu.memory_space<vmem>>, vector<1x128xf32>
    %cst_87 = arith.constant dense<0.000000e+00> : vector<128xf32>
    %118 = vector.multi_reduction <add>, %115, %cst_87 [0] : vector<32x128xf32> to vector<128xf32>
    %119 = vector.shape_cast %118 : vector<128xf32> to vector<1x128xf32>
    %cst_88 = arith.constant 3.200000e+01 : f32
    %120 = vector.broadcast %cst_88 : f32 to vector<1x128xf32>
    %121 = arith.divf %119, %120 : vector<1x128xf32>
    %122 = vector.broadcast %121 : vector<1x128xf32> to vector<32x128xf32>
    %123 = arith.subf %115, %122 : vector<32x128xf32>
    %124 = arith.mulf %123, %123 : vector<32x128xf32>
    %cst_89 = arith.constant dense<0.000000e+00> : vector<128xf32>
    %125 = vector.multi_reduction <add>, %124, %cst_89 [0] : vector<32x128xf32> to vector<128xf32>
    %126 = vector.shape_cast %125 : vector<128xf32> to vector<1x128xf32>
    %cst_90 = arith.constant 3.200000e+01 : f32
    %127 = vector.broadcast %cst_90 : f32 to vector<1x128xf32>
    %128 = arith.divf %126, %127 : vector<1x128xf32>
    %cst_91 = arith.constant 9.99999974E-6 : f32
    %129 = vector.broadcast %cst_91 : f32 to vector<1x128xf32>
    %130 = arith.addf %128, %129 : vector<1x128xf32>
    %131 = math.rsqrt %130 : vector<1x128xf32>
    %132 = arith.mulf %131, %116 : vector<1x128xf32>
    %133 = vector.broadcast %132 : vector<1x128xf32> to vector<32x128xf32>
    %134 = arith.mulf %115, %133 : vector<32x128xf32>
    %135 = arith.mulf %121, %132 : vector<1x128xf32>
    %136 = arith.subf %117, %135 : vector<1x128xf32>
    %137 = vector.broadcast %136 : vector<1x128xf32> to vector<32x128xf32>
    %138 = arith.addf %134, %137 : vector<32x128xf32>
    %c0_92 = arith.constant 0 : index
    %c0_93 = arith.constant 0 : index
    %139 = vector.load %arg9[%c0_92, %c0_93] : memref<32x128xf32, #tpu.memory_space<vmem>>, vector<32x128xf32>
    tpu.vector_store %arg9[%c0_92, %c0_93], %138 {strides = array<i32>} : memref<32x128xf32, #tpu.memory_space<vmem>>, vector<32x128xf32>,
    return
  }
  func.func @transform_0(%arg0: i32) -> (i32, i32) {
    %c0_i32 = arith.constant 0 : i32
    %c0_i32_0 = arith.constant 0 : i32
    %c0_i32_1 = arith.constant 0 : i32
    return %c0_i32, %c0_i32_0 : i32, i32
  }
  func.func @transform_1(%arg0: i32) -> (i32, i32) {
    %c0_i32 = arith.constant 0 : i32
    %c0_i32_0 = arith.constant 0 : i32
    %c0_i32_1 = arith.constant 0 : i32
    return %c0_i32, %c0_i32_0 : i32, i32
  }
  func.func @transform_2(%arg0: i32) -> (i32, i32) {
    %c0_i32 = arith.constant 0 : i32
    %c0_i32_0 = arith.constant 0 : i32
    %c0_i32_1 = arith.constant 0 : i32
    return %c0_i32, %c0_i32_0 : i32, i32
  }
  func.func @transform_3(%arg0: i32) -> (i32, i32) {
    %c0_i32 = arith.constant 0 : i32
    %c0_i32_0 = arith.constant 0 : i32
    %c0_i32_1 = arith.constant 0 : i32
    return %c0_i32, %c0_i32_0 : i32, i32
  }
  func.func @transform_4(%arg0: i32) -> (i32, i32, i32) {
    %c0_i32 = arith.constant 0 : i32
    %c0_i32_0 = arith.constant 0 : i32
    %c0_i32_1 = arith.constant 0 : i32
    %c0_i32_2 = arith.constant 0 : i32
    return %c0_i32, %c0_i32_0, %c0_i32_1 : i32, i32, i32
  }
  func.func @transform_5(%arg0: i32) -> (i32, i32, i32) {
    %c0_i32 = arith.constant 0 : i32
    %c0_i32_0 = arith.constant 0 : i32
    %c0_i32_1 = arith.constant 0 : i32
    %c0_i32_2 = arith.constant 0 : i32
    return %c0_i32, %c0_i32_0, %c0_i32_1 : i32, i32, i32
  }
  func.func @transform_6(%arg0: i32) -> (i32, i32) {
    %c0_i32 = arith.constant 0 : i32
    %c0_i32_0 = arith.constant 0 : i32
    %c0_i32_1 = arith.constant 0 : i32
    return %c0_i32, %c0_i32_0 : i32, i32
  }
  func.func @transform_7(%arg0: i32) -> (i32, i32) {
    %c0_i32 = arith.constant 0 : i32
    %c0_i32_0 = arith.constant 0 : i32
    %c0_i32_1 = arith.constant 0 : i32
    return %c0_i32, %c0_i32_0 : i32, i32
  }
  func.func @transform_8(%arg0: i32) -> (i32, i32) {
    %c0_i32 = arith.constant 0 : i32
    %c0_i32_0 = arith.constant 0 : i32
    %c0_i32_1 = arith.constant 0 : i32
    return %c0_i32, %c0_i32_0 : i32, i32
  }
}

</mosaic_0001>

<llo_original>
// kernel: tpu_custom_call.1
$region0: #{tpu_custom_call.1}
  #allocation0 [shape = 'u32[]', space=smem, size = 0x4, offset = 0x4, fixed_abs, tag = 'smem constant byte address 0x4 - core index']
  #allocation1 [shape = 'u32[72,128]{1,0:T(1,128)}', space=vmem, size = 0x9000, scoped, tag = 'internal scratch']
  %s0 = inlined_call_operand.hbm [shape: bf16[128,128], index: 0, kind: input, shape index: {}]
  %s1 = inlined_call_operand.hbm [shape: bf16[128,128], index: 1, kind: input, shape index: {}]
  %s2 = inlined_call_operand.vmem [shape: f32[1,128], index: 2, kind: input, shape index: {}]
  %s3 = inlined_call_operand.vmem [shape: f32[1,128], index: 3, kind: input, shape index: {}]
  %s4 = inlined_call_operand.hbm [shape: bf16[9,32,128], index: 4, kind: input, shape index: {}]
  %s5 = inlined_call_operand.hbm [shape: bf16[9,128,128], index: 5, kind: input, shape index: {}]
  %s6 = inlined_call_operand.vmem [shape: f32[1,128], index: 6, kind: input, shape index: {}]
  %s7 = inlined_call_operand.vmem [shape: f32[1,128], index: 7, kind: input, shape index: {}]
  %s8 = inlined_call_operand.hbm [shape: f32[32,128], index: 8, kind: output, shape index: {}]
  %s9 = sld [smem:[#allocation0]]
  $region58: #{tpu_custom_call.1} parent=0
    _
  %s11 = ssub.s32 1, %s9
  %s12 = scalar_select 0, %s11, %s9
  $region1: #{tpu_custom_call.1} parent=0
    #allocation2 [shape = 'u8[32768]{0}', space=vmem, size = 0x8000, scoped, tag = 'input window, operand 0, single buffered']
    #allocation3 [shape = 's32[1]{0}', space=sflag, size = 0x4, scoped, tag = 'scoped memory for tpu_custom_call.1']
    #allocation4 [shape = 's32[1]{0}', space=sflag, size = 0x4, scoped, tag = 'scoped memory for tpu_custom_call.1']
    #allocation5 [shape = 'u8[32768]{0}', space=vmem, size = 0x8000, scoped, tag = 'input window, operand 1, single buffered']
    #allocation6 [shape = 's32[1]{0}', space=sflag, size = 0x4, scoped, tag = 'scoped memory for tpu_custom_call.1']
    #allocation7 [shape = 'u8[73728]{0}', space=vmem, size = 0x12000, scoped, tag = 'input window, operand 4, single buffered']
    #allocation8 [shape = 'u8[294912]{0}', space=vmem, size = 0x48000, scoped, tag = 'input window, operand 5, single buffered']
    #allocation9 [shape = 's32[1]{0}', space=sflag, size = 0x4, scoped, tag = 'scoped memory for tpu_custom_call.1']
    #allocation10 [shape = 'u8[16384]{0}', space=vmem, size = 0x4000, scoped, tag = 'output window, operand 0, single buffered']
    %13 = vsyncpa [#allocation3], 0
    %14 = vsyncpa [#allocation6], 0
    %15 = vsyncpa [#allocation9], 0
    %16 = vsyncpa [#allocation4], 0
    // Predicated region
    $region2: #{tpu_custom_call.1} parent=1 // pred_check
      _
    $region3: #{tpu_custom_call.1} parent=1 // pred_check_branch
      %18 = sbr.rel (0) target = $region5
    $region4: #{tpu_custom_call.1} parent=1 // pred_region
      %20 = vsyncadd [#allocation3], 0
      %s21 = sshll.u32 %s0, 4
      %s22 = int_to_ptr.hbm [resolvable:$true] %s21
      %s23 = sshll.u32 [#allocation2], 4
      %s24 = int_to_ptr.vmem [resolvable:$true] %s23
      %29 = dma.hbm_to_vmem [thread:$0]  %s22, 1024, %s24, [#allocation3], 64, 64, 4
    $region5: #{tpu_custom_call.1} parent=1 // pred_fallthru
      _
    // Predicated region
    $region6: #{tpu_custom_call.1} parent=1 // pred_check
      _
    $region7: #{tpu_custom_call.1} parent=1 // pred_check_branch
      %31 = sbr.rel (0) target = $region9
    $region8: #{tpu_custom_call.1} parent=1 // pred_region
      %33 = vsyncadd [#allocation6], 0
      %s34 = sshll.u32 %s1, 4
      %s35 = int_to_ptr.hbm [resolvable:$true] %s34
      %s36 = sshll.u32 [#allocation5], 4
      %s37 = int_to_ptr.vmem [resolvable:$true] %s36
      %42 = dma.hbm_to_vmem [thread:$0]  %s35, 1024, %s37, [#allocation6], 64, 64, 4
    $region9: #{tpu_custom_call.1} parent=1 // pred_fallthru
      _
    // Predicated region
    $region10: #{tpu_custom_call.1} parent=1 // pred_check
      _
    $region11: #{tpu_custom_call.1} parent=1 // pred_check_branch
      %44 = sbr.rel (0) target = $region13
    $region12: #{tpu_custom_call.1} parent=1 // pred_region
      _
    $region13: #{tpu_custom_call.1} parent=1 // pred_fallthru
      _
    // Predicated region
    $region14: #{tpu_custom_call.1} parent=1 // pred_check
      _
    $region15: #{tpu_custom_call.1} parent=1 // pred_check_branch
      %46 = sbr.rel (0) target = $region17
    $region16: #{tpu_custom_call.1} parent=1 // pred_region
      _
    $region17: #{tpu_custom_call.1} parent=1 // pred_fallthru
      _
    // Predicated region
    $region18: #{tpu_custom_call.1} parent=1 // pred_check
      _
    $region19: #{tpu_custom_call.1} parent=1 // pred_check_branch
      %48 = sbr.rel (0) target = $region21
    $region20: #{tpu_custom_call.1} parent=1 // pred_region
      %50 = vsyncadd [#allocation6], 0
      %s51 = sshll.u32 %s4, 4
      %s52 = int_to_ptr.hbm [resolvable:$true] %s51
      %s53 = sshll.u32 [#allocation7], 4
      %s54 = int_to_ptr.vmem [resolvable:$true] %s53
      %59 = dma.hbm_to_vmem [thread:$0]  %s52, 2304, %s54, [#allocation6], 64, 64, 4
    $region21: #{tpu_custom_call.1} parent=1 // pred_fallthru
      _
    // Predicated region
    $region22: #{tpu_custom_call.1} parent=1 // pred_check
      _
    $region23: #{tpu_custom_call.1} parent=1 // pred_check_branch
      %61 = sbr.rel (0) target = $region25
    $region24: #{tpu_custom_call.1} parent=1 // pred_region
      %63 = vsyncadd [#allocation9], 0
      %s64 = sshll.u32 %s5, 4
      %s65 = int_to_ptr.hbm [resolvable:$true] %s64
      %s66 = sshll.u32 [#allocation8], 4
      %s67 = int_to_ptr.vmem [resolvable:$true] %s66
      %72 = dma.hbm_to_vmem [thread:$0]  %s65, 9216, %s67, [#allocation9], 64, 64, 4
    $region25: #{tpu_custom_call.1} parent=1 // pred_fallthru
      _
    // Predicated region
    $region26: #{tpu_custom_call.1} parent=1 // pred_check
      _
    $region27: #{tpu_custom_call.1} parent=1 // pred_check_branch
      %74 = sbr.rel (0) target = $region29
    $region28: #{tpu_custom_call.1} parent=1 // pred_region
      _
    $region29: #{tpu_custom_call.1} parent=1 // pred_fallthru
      _
    // Predicated region
    $region30: #{tpu_custom_call.1} parent=1 // pred_check
      _
    $region31: #{tpu_custom_call.1} parent=1 // pred_check_branch
      %76 = sbr.rel (0) target = $region33
    $region32: #{tpu_custom_call.1} parent=1 // pred_region
      _
    $region33: #{tpu_custom_call.1} parent=1 // pred_fallthru
      _
    // Predicated region
    $region34: #{tpu_custom_call.1} parent=1 // pred_check
      _
    $region35: #{tpu_custom_call.1} parent=1 // pred_check_branch
      %78 = sbr.rel (0) target = $region37
    $region36: #{tpu_custom_call.1} parent=1 // pred_region
      %80 = dma.done [#allocation3], 1024
    $region37: #{tpu_custom_call.1} parent=1 // pred_fallthru
      _
    // Predicated region
    $region38: #{tpu_custom_call.1} parent=1 // pred_check
      _
    $region39: #{tpu_custom_call.1} parent=1 // pred_check_branch
      %82 = sbr.rel (0) target = $region41
    $region40: #{tpu_custom_call.1} parent=1 // pred_region
      %84 = dma.done [#allocation6], 1024
    $region41: #{tpu_custom_call.1} parent=1 // pred_fallthru
      _
    // Predicated region
    $region42: #{tpu_custom_call.1} parent=1 // pred_check
      _
    $region43: #{tpu_custom_call.1} parent=1 // pred_check_branch
      %86 = sbr.rel (0) target = $region45
    $region44: #{tpu_custom_call.1} parent=1 // pred_region
      %88 = dma.done [#allocation6], 2304
    $region45: #{tpu_custom_call.1} parent=1 // pred_fallthru
      _
    // Predicated region
    $region46: #{tpu_custom_call.1} parent=1 // pred_check
      _
    $region47: #{tpu_custom_call.1} parent=1 // pred_check_branch
      %90 = sbr.rel (0) target = $region49
    $region48: #{tpu_custom_call.1} parent=1 // pred_region
      %92 = dma.done [#allocation9], 9216
    $region49: #{tpu_custom_call.1} parent=1 // pred_fallthru
      _
    %v93 = vld [vmem:[#allocation2] sm:$0xf]
    %v94 = vld [vmem:[#allocation2 + $0x4] sm:$0xf]
    %v95 = vld [vmem:[#allocation2 + $0x8] sm:$0xf]
    %v96 = vld [vmem:[#allocation2 + $0xc] sm:$0xf]
    %v97 = vld [vmem:[#allocation2 + $0x10] sm:$0xf]
    %v98 = vld [vmem:[#allocation2 + $0x14] sm:$0xf]
    %v99 = vld [vmem:[#allocation2 + $0x18] sm:$0xf]
    %v100 = vld [vmem:[#allocation2 + $0x1c] sm:$0xf]
    %v101 = vld [vmem:[#allocation2 + $0x20] sm:$0xf]
    %v102 = vld [vmem:[#allocation2 + $0x24] sm:$0xf]
    %v103 = vld [vmem:[#allocation2 + $0x28] sm:$0xf]
    %v104 = vld [vmem:[#allocation2 + $0x2c] sm:$0xf]
    %v105 = vld [vmem:[#allocation2 + $0x30] sm:$0xf]
    %v106 = vld [vmem:[#allocation2 + $0x34] sm:$0xf]
    %v107 = vld [vmem:[#allocation2 + $0x38] sm:$0xf]
    %v108 = vld [vmem:[#allocation2 + $0x3c] sm:$0xf]
    %v109 = vld [vmem:[#allocation5] sm:$0xf]
    %v110 = vld [vmem:[#allocation5 + $0x4] sm:$0xf]
    %v111 = vld [vmem:[#allocation5 + $0x8] sm:$0xf]
    %v112 = vld [vmem:[#allocation5 + $0xc] sm:$0xf]
    %v113 = vld [vmem:[#allocation5 + $0x10] sm:$0xf]
    %v114 = vld [vmem:[#allocation5 + $0x14] sm:$0xf]
    %v115 = vld [vmem:[#allocation5 + $0x18] sm:$0xf]
    %v116 = vld [vmem:[#allocation5 + $0x1c] sm:$0xf]
    %v117 = vld [vmem:[#allocation5 + $0x20] sm:$0xf]
    %v118 = vld [vmem:[#allocation5 + $0x24] sm:$0xf]
    %v119 = vld [vmem:[#allocation5 + $0x28] sm:$0xf]
    %v120 = vld [vmem:[#allocation5 + $0x2c] sm:$0xf]
    %v121 = vld [vmem:[#allocation5 + $0x30] sm:$0xf]
    %v122 = vld [vmem:[#allocation5 + $0x34] sm:$0xf]
    %v123 = vld [vmem:[#allocation5 + $0x38] sm:$0xf]
    %v124 = vld [vmem:[#allocation5 + $0x3c] sm:$0xf]
    %v141 = vunpack.c.l.b16 %v93
    %v142 = vunpack.c.l.b16 %v94
    %v143 = vunpack.c.l.b16 %v95
    %v144 = vunpack.c.l.b16 %v96
    %v145 = vunpack.c.l.b16 %v97
    %v146 = vunpack.c.l.b16 %v98
    %v147 = vunpack.c.l.b16 %v99
    %v148 = vunpack.c.l.b16 %v100
    %v149 = vunpack.c.l.b16 %v101
    %v150 = vunpack.c.l.b16 %v102
    %v151 = vunpack.c.l.b16 %v103
    %v152 = vunpack.c.l.b16 %v104
    %v153 = vunpack.c.l.b16 %v105
    %v154 = vunpack.c.l.b16 %v106
    %v155 = vunpack.c.l.b16 %v107
    %v156 = vunpack.c.l.b16 %v108
    %v157 = vpack.c.b16 %v142, %v141
    %v158 = vpack.c.b16 %v144, %v143
    %v159 = vpack.c.b16 %v146, %v145
    %v160 = vpack.c.b16 %v148, %v147
    %v161 = vpack.c.b16 %v150, %v149
    %v162 = vpack.c.b16 %v152, %v151
    %v163 = vpack.c.b16 %v154, %v153
    %v164 = vpack.c.b16 %v156, %v155
    %v189 = vunpack.c.l.b16 %v109
    %v190 = vunpack.c.l.b16 %v110
    %v191 = vunpack.c.l.b16 %v111
    %v192 = vunpack.c.l.b16 %v112
    %v193 = vunpack.c.l.b16 %v113
    %v194 = vunpack.c.l.b16 %v114
    %v195 = vunpack.c.l.b16 %v115
    %v196 = vunpack.c.l.b16 %v116
    %v197 = vunpack.c.l.b16 %v117
    %v198 = vunpack.c.l.b16 %v118
    %v199 = vunpack.c.l.b16 %v119
    %v200 = vunpack.c.l.b16 %v120
    %v201 = vunpack.c.l.b16 %v121
    %v202 = vunpack.c.l.b16 %v122
    %v203 = vunpack.c.l.b16 %v123
    %v204 = vunpack.c.l.b16 %v124
    %v205 = vpack.c.b16 %v190, %v189
    %v206 = vpack.c.b16 %v192, %v191
    %v207 = vpack.c.b16 %v194, %v193
    %v208 = vpack.c.b16 %v196, %v195
    %v209 = vpack.c.b16 %v198, %v197
    %v210 = vpack.c.b16 %v200, %v199
    %v211 = vpack.c.b16 %v202, %v201
    %v212 = vpack.c.b16 %v204, %v203
    %221 = vmatpush.bf16.msra.mxu0 %v212
    %222 = vmatpush.bf16.msra.mxu0 %v211
    %223 = vmatpush.bf16.msra.mxu0 %v210
    %224 = vmatpush.bf16.msra.mxu0 %v209
    %225 = vmatpush.bf16.msra.mxu0 %v208
    %226 = vmatpush.bf16.msra.mxu0 %v207
    %227 = vmatpush.bf16.msra.mxu0 %v206
    %228 = vmatpush.bf16.msra.mxu0 %v205
    %229 = vmatmul.bf16.gmra.mxu0 %v157
    %v230 = vpop.f32.mrf.mxu0
    %v231 = vadd.f32 0.0, %v230
    %v232 = vpop.f32.mrf.mxu0
    %v233 = vadd.f32 0.0, %v232
    %234 = vmatmul.bf16.gmra.mxu0 %v158
    %v235 = vpop.f32.mrf.mxu0
    %v236 = vadd.f32 0.0, %v235
    %v237 = vpop.f32.mrf.mxu0
    %v238 = vadd.f32 0.0, %v237
    %239 = vmatmul.bf16.gmra.mxu0 %v159
    %v240 = vpop.f32.mrf.mxu0
    %v241 = vadd.f32 0.0, %v240
    %v242 = vpop.f32.mrf.mxu0
    %v243 = vadd.f32 0.0, %v242
    %244 = vmatmul.bf16.gmra.mxu0 %v160
    %v245 = vpop.f32.mrf.mxu0
    %v246 = vadd.f32 0.0, %v245
    %v247 = vpop.f32.mrf.mxu0
    %v248 = vadd.f32 0.0, %v247
    %249 = vmatmul.bf16.gmra.mxu0 %v161
    %v250 = vpop.f32.mrf.mxu0
    %v251 = vadd.f32 0.0, %v250
    %v252 = vpop.f32.mrf.mxu0
    %v253 = vadd.f32 0.0, %v252
    %254 = vmatmul.bf16.gmra.mxu0 %v162
    %v255 = vpop.f32.mrf.mxu0
    %v256 = vadd.f32 0.0, %v255
    %v257 = vpop.f32.mrf.mxu0
    %v258 = vadd.f32 0.0, %v257
    %259 = vmatmul.bf16.gmra.mxu0 %v163
    %v260 = vpop.f32.mrf.mxu0
    %v261 = vadd.f32 0.0, %v260
    %v262 = vpop.f32.mrf.mxu0
    %v263 = vadd.f32 0.0, %v262
    %264 = vmatmul.bf16.gmra.mxu0 %v164
    %v265 = vpop.f32.mrf.mxu0
    %v266 = vadd.f32 0.0, %v265
    %v267 = vpop.f32.mrf.mxu0
    %v268 = vadd.f32 0.0, %v267
    %269 = vdwg.mxu0
    %v270 = vld [vmem:[%s2] sm:$0x1]
    %v271 = vld [vmem:[%s3] sm:$0x1]
    %v272 = vadd.f32 %v231, %v233
    %v273 = vadd.f32 %v272, %v236
    %v274 = vadd.f32 %v273, %v238
    %v275 = vadd.f32 %v274, %v241
    %v276 = vadd.f32 %v275, %v243
    %v277 = vadd.f32 %v276, %v246
    %v278 = vadd.f32 %v277, %v248
    %v279 = vadd.f32 %v278, %v251
    %v280 = vadd.f32 %v279, %v253
    %v281 = vadd.f32 %v280, %v256
    %v282 = vadd.f32 %v281, %v258
    %v283 = vadd.f32 %v282, %v261
    %v284 = vadd.f32 %v283, %v263
    %v285 = vadd.f32 %v284, %v266
    %v286 = vadd.f32 %v285, %v268
    %v287 = vrot.slane %v286, 4
    %v288 = vadd.f32 %v286, %v287
    %v289 = vrot.slane %v288, 2
    %v290 = vadd.f32 %v288, %v289
    %v291 = vrot.slane %v290, 1
    %v292 = vadd.f32 %v290, %v291
    %v293 = vrcp.pop 128.0
    %v294 = vmul.f32 128.0, %v293
    %v295 = vsub.f32 1.0, %v294
    %v296 = vmul.f32 %v293, %v295
    %v297 = vadd.f32 %v293, %v296
    %vm298 = vweird.f32 %v293
    %v299 = vsel %vm298, %v293, %v297
    %v300 = vmul.f32 %v292, %v299
    %v301 = vsub.f32 %v231, %v300
    %v302 = vsub.f32 %v233, %v300
    %v303 = vsub.f32 %v236, %v300
    %v304 = vsub.f32 %v238, %v300
    %v305 = vsub.f32 %v241, %v300
    %v306 = vsub.f32 %v243, %v300
    %v307 = vsub.f32 %v246, %v300
    %v308 = vsub.f32 %v248, %v300
    %v309 = vsub.f32 %v251, %v300
    %v310 = vsub.f32 %v253, %v300
    %v311 = vsub.f32 %v256, %v300
    %v312 = vsub.f32 %v258, %v300
    %v313 = vsub.f32 %v261, %v300
    %v314 = vsub.f32 %v263, %v300
    %v315 = vsub.f32 %v266, %v300
    %v316 = vsub.f32 %v268, %v300
    %v317 = vmul.f32 %v301, %v301
    %v318 = vmul.f32 %v302, %v302
    %v319 = vmul.f32 %v303, %v303
    %v320 = vmul.f32 %v304, %v304
    %v321 = vmul.f32 %v305, %v305
    %v322 = vmul.f32 %v306, %v306
    %v323 = vmul.f32 %v307, %v307
    %v324 = vmul.f32 %v308, %v308
    %v325 = vmul.f32 %v309, %v309
    %v326 = vmul.f32 %v310, %v310
    %v327 = vmul.f32 %v311, %v311
    %v328 = vmul.f32 %v312, %v312
    %v329 = vmul.f32 %v313, %v313
    %v330 = vmul.f32 %v314, %v314
    %v331 = vmul.f32 %v315, %v315
    %v332 = vmul.f32 %v316, %v316
    %v333 = vadd.f32 %v317, %v318
    %v334 = vadd.f32 %v333, %v319
    %v335 = vadd.f32 %v334, %v320
    %v336 = vadd.f32 %v335, %v321
    %v337 = vadd.f32 %v336, %v322
    %v338 = vadd.f32 %v337, %v323
    %v339 = vadd.f32 %v338, %v324
    %v340 = vadd.f32 %v339, %v325
    %v341 = vadd.f32 %v340, %v326
    %v342 = vadd.f32 %v341, %v327
    %v343 = vadd.f32 %v342, %v328
    %v344 = vadd.f32 %v343, %v329
    %v345 = vadd.f32 %v344, %v330
    %v346 = vadd.f32 %v345, %v331
    %v347 = vadd.f32 %v346, %v332
    %v348 = vrot.slane %v347, 4
    %v349 = vadd.f32 %v347, %v348
    %v350 = vrot.slane %v349, 2
    %v351 = vadd.f32 %v349, %v350
    %v352 = vrot.slane %v351, 1
    %v353 = vadd.f32 %v351, %v352
    %v354 = vmul.f32 %v353, %v299
    %v355 = vadd.f32 %v354, 1e-05
    %v356 = vrsqrt.pop %v355
    %v357 = vmul.f32 %v356, %v355
    %v358 = vmul.f32 %v357, %v356
    %v359 = vmul.f32 0.5, %v358
    %v360 = vsub.f32 1.5, %v359
    %v361 = vmul.f32 %v356, %v360
    %vm362 = vweird.f32 %v355
    %vm363 = vweird.f32 %v356
    %vm364 = vmor %vm362, %vm363
    %v365 = vsel %vm364, %v356, %v361
    %v366 = vmul.f32 %v365, %v270
    %v367 = vperm.slane %v366, 0
    %v368 = vmul.f32 %v231, %v367
    %v369 = vmul.f32 %v233, %v367
    %v370 = vmul.f32 %v236, %v367
    %v371 = vmul.f32 %v238, %v367
    %v372 = vmul.f32 %v241, %v367
    %v373 = vmul.f32 %v243, %v367
    %v374 = vmul.f32 %v246, %v367
    %v375 = vmul.f32 %v248, %v367
    %v376 = vmul.f32 %v251, %v367
    %v377 = vmul.f32 %v253, %v367
    %v378 = vmul.f32 %v256, %v367
    %v379 = vmul.f32 %v258, %v367
    %v380 = vmul.f32 %v261, %v367
    %v381 = vmul.f32 %v263, %v367
    %v382 = vmul.f32 %v266, %v367
    %v383 = vmul.f32 %v268, %v367
    %v384 = vmul.f32 %v300, %v366
    %v385 = vsub.f32 %v271, %v384
    %v387 = vperm.slane %v385, 0
    %v389 = vadd.f32 %v368, %v387
    %v390 = vadd.f32 %v369, %v387
    %v391 = vadd.f32 %v370, %v387
    %v392 = vadd.f32 %v371, %v387
    %v393 = vadd.f32 %v372, %v387
    %v394 = vadd.f32 %v373, %v387
    %v395 = vadd.f32 %v374, %v387
    %v396 = vadd.f32 %v375, %v387
    %v397 = vadd.f32 %v376, %v387
    %v398 = vadd.f32 %v377, %v387
    %v399 = vadd.f32 %v378, %v387
    %v400 = vadd.f32 %v379, %v387
    %v401 = vadd.f32 %v380, %v387
    %v402 = vadd.f32 %v381, %v387
    %v403 = vadd.f32 %v382, %v387
    %v404 = vadd.f32 %v383, %v387
    %v405 = vmin.f32 %v389, 20.0
    %v406 = vmin.f32 %v390, 20.0
    %v407 = vmin.f32 %v391, 20.0
    %v408 = vmin.f32 %v392, 20.0
    %v409 = vmin.f32 %v393, 20.0
    %v410 = vmin.f32 %v394, 20.0
    %v411 = vmin.f32 %v395, 20.0
    %v412 = vmin.f32 %v396, 20.0
    %v413 = vmin.f32 %v397, 20.0
    %v414 = vmin.f32 %v398, 20.0
    %v415 = vmin.f32 %v399, 20.0
    %v416 = vmin.f32 %v400, 20.0
    %v417 = vmin.f32 %v401, 20.0
    %v418 = vmin.f32 %v402, 20.0
    %v419 = vmin.f32 %v403, 20.0
    %v420 = vmin.f32 %v404, 20.0
    %v421 = vmul.f32 %v405, 1.442695
    %v422 = vpow.pop %v421
    %v423 = vmul.f32 %v406, 1.442695
    %v424 = vpow.pop %v423
    %v425 = vmul.f32 %v407, 1.442695
    %v426 = vpow.pop %v425
    %v427 = vmul.f32 %v408, 1.442695
    %v428 = vpow.pop %v427
    %v429 = vmul.f32 %v409, 1.442695
    %v430 = vpow.pop %v429
    %v431 = vmul.f32 %v410, 1.442695
    %v432 = vpow.pop %v431
    %v433 = vmul.f32 %v411, 1.442695
    %v434 = vpow.pop %v433
    %v435 = vmul.f32 %v412, 1.442695
    %v436 = vpow.pop %v435
    %v437 = vmul.f32 %v413, 1.442695
    %v438 = vpow.pop %v437
    %v439 = vmul.f32 %v414, 1.442695
    %v440 = vpow.pop %v439
    %v441 = vmul.f32 %v415, 1.442695
    %v442 = vpow.pop %v441
    %v443 = vmul.f32 %v416, 1.442695
    %v444 = vpow.pop %v443
    %v445 = vmul.f32 %v417, 1.442695
    %v446 = vpow.pop %v445
    %v447 = vmul.f32 %v418, 1.442695
    %v448 = vpow.pop %v447
    %v449 = vmul.f32 %v419, 1.442695
    %v450 = vpow.pop %v449
    %v451 = vmul.f32 %v420, 1.442695
    %v452 = vpow.pop %v451
    %v453 = vadd.f32 %v422, 1.0
    %v454 = vadd.f32 %v424, 1.0
    %v455 = vadd.f32 %v426, 1.0
    %v456 = vadd.f32 %v428, 1.0
    %v457 = vadd.f32 %v430, 1.0
    %v458 = vadd.f32 %v432, 1.0
    %v459 = vadd.f32 %v434, 1.0
    %v460 = vadd.f32 %v436, 1.0
    %v461 = vadd.f32 %v438, 1.0
    %v462 = vadd.f32 %v440, 1.0
    %v463 = vadd.f32 %v442, 1.0
    %v464 = vadd.f32 %v444, 1.0
    %v465 = vadd.f32 %v446, 1.0
    %v466 = vadd.f32 %v448, 1.0
    %v467 = vadd.f32 %v450, 1.0
    %v468 = vadd.f32 %v452, 1.0
    %v469 = vmul.f32 %v453, %v453
    %v470 = vmul.f32 %v454, %v454
    %v471 = vmul.f32 %v455, %v455
    %v472 = vmul.f32 %v456, %v456
    %v473 = vmul.f32 %v457, %v457
    %v474 = vmul.f32 %v458, %v458
    %v475 = vmul.f32 %v459, %v459
    %v476 = vmul.f32 %v460, %v460
    %v477 = vmul.f32 %v461, %v461
    %v478 = vmul.f32 %v462, %v462
    %v479 = vmul.f32 %v463, %v463
    %v480 = vmul.f32 %v464, %v464
    %v481 = vmul.f32 %v465, %v465
    %v482 = vmul.f32 %v466, %v466
    %v483 = vmul.f32 %v467, %v467
    %v484 = vmul.f32 %v468, %v468
    %v485 = vadd.f32 %v469, 1.0
    %v486 = vadd.f32 %v470, 1.0
    %v487 = vadd.f32 %v471, 1.0
    %v488 = vadd.f32 %v472, 1.0
    %v489 = vadd.f32 %v473, 1.0
    %v490 = vadd.f32 %v474, 1.0
    %v491 = vadd.f32 %v475, 1.0
    %v492 = vadd.f32 %v476, 1.0
    %v493 = vadd.f32 %v477, 1.0
    %v494 = vadd.f32 %v478, 1.0
    %v495 = vadd.f32 %v479, 1.0
    %v496 = vadd.f32 %v480, 1.0
    %v497 = vadd.f32 %v481, 1.0
    %v498 = vadd.f32 %v482, 1.0
    %v499 = vadd.f32 %v483, 1.0
    %v500 = vadd.f32 %v484, 1.0
    %v501 = vrcp.pop %v485
    %v502 = vrcp.pop %v486
    %v503 = vrcp.pop %v487
    %v504 = vrcp.pop %v488
    %v505 = vrcp.pop %v489
    %v506 = vrcp.pop %v490
    %v507 = vrcp.pop %v491
    %v508 = vrcp.pop %v492
    %v509 = vrcp.pop %v493
    %v510 = vrcp.pop %v494
    %v511 = vrcp.pop %v495
    %v512 = vrcp.pop %v496
    %v513 = vrcp.pop %v497
    %v514 = vrcp.pop %v498
    %v515 = vrcp.pop %v499
    %v516 = vrcp.pop %v500
    %v517 = vmul.f32 %v501, 2.0
    %v518 = vmul.f32 %v502, 2.0
    %v519 = vmul.f32 %v503, 2.0
    %v520 = vmul.f32 %v504, 2.0
    %v521 = vmul.f32 %v505, 2.0
    %v522 = vmul.f32 %v506, 2.0
    %v523 = vmul.f32 %v507, 2.0
    %v524 = vmul.f32 %v508, 2.0
    %v525 = vmul.f32 %v509, 2.0
    %v526 = vmul.f32 %v510, 2.0
    %v527 = vmul.f32 %v511, 2.0
    %v528 = vmul.f32 %v512, 2.0
    %v529 = vmul.f32 %v513, 2.0
    %v530 = vmul.f32 %v514, 2.0
    %v531 = vmul.f32 %v515, 2.0
    %v532 = vmul.f32 %v516, 2.0
    %v533 = vsub.f32 1.0, %v517
    %v534 = vsub.f32 1.0, %v518
    %v535 = vsub.f32 1.0, %v519
    %v536 = vsub.f32 1.0, %v520
    %v537 = vsub.f32 1.0, %v521
    %v538 = vsub.f32 1.0, %v522
    %v539 = vsub.f32 1.0, %v523
    %v540 = vsub.f32 1.0, %v524
    %v541 = vsub.f32 1.0, %v525
    %v542 = vsub.f32 1.0, %v526
    %v543 = vsub.f32 1.0, %v527
    %v544 = vsub.f32 1.0, %v528
    %v545 = vsub.f32 1.0, %v529
    %v546 = vsub.f32 1.0, %v530
    %v547 = vsub.f32 1.0, %v531
    %v548 = vsub.f32 1.0, %v532
    %v549 = vmul.f32 %v389, %v533
    %v550 = vmul.f32 %v390, %v534
    %v551 = vmul.f32 %v391, %v535
    %v552 = vmul.f32 %v392, %v536
    %v553 = vmul.f32 %v393, %v537
    %v554 = vmul.f32 %v394, %v538
    %v555 = vmul.f32 %v395, %v539
    %v556 = vmul.f32 %v396, %v540
    %v557 = vmul.f32 %v397, %v541
    %v558 = vmul.f32 %v398, %v542
    %v559 = vmul.f32 %v399, %v543
    %v560 = vmul.f32 %v400, %v544
    %v561 = vmul.f32 %v401, %v545
    %v562 = vmul.f32 %v402, %v546
    %v563 = vmul.f32 %v403, %v547
    %v564 = vmul.f32 %v404, %v548
    %v565 = vpack.c.bf16 %v550, %v549
    %v566 = vpack.c.bf16 %v552, %v551
    %v567 = vpack.c.bf16 %v554, %v553
    %v568 = vpack.c.bf16 %v556, %v555
    %v569 = vpack.c.bf16 %v558, %v557
    %v570 = vpack.c.bf16 %v560, %v559
    %v571 = vpack.c.bf16 %v562, %v561
    %v572 = vpack.c.bf16 %v564, %v563
    %v573 = vld [vmem:[#allocation7] sm:$0xf]
    %v574 = vld [vmem:[#allocation7 + $0x4] sm:$0xf]
    %v575 = vld [vmem:[#allocation7 + $0x8] sm:$0xf]
    %v576 = vld [vmem:[#allocation7 + $0xc] sm:$0xf]
    %v581 = vunpack.c.l.b16 %v573
    %v582 = vunpack.c.l.b16 %v574
    %v583 = vunpack.c.l.b16 %v575
    %v584 = vunpack.c.l.b16 %v576
    %v585 = vpack.c.b16 %v582, %v581
    %v586 = vpack.c.b16 %v584, %v583
    %589 = vmatpush.bf16.msra.mxu0 %v572
    %590 = vmatpush.bf16.msra.mxu0 %v571
    %591 = vmatpush.bf16.msra.mxu0 %v570
    %592 = vmatpush.bf16.msra.mxu0 %v569
    %593 = vmatpush.bf16.msra.mxu0 %v568
    %594 = vmatpush.bf16.msra.mxu0 %v567
    %595 = vmatpush.bf16.msra.mxu0 %v566
    %596 = vmatpush.bf16.msra.mxu0 %v565
    %597 = vmatmul.bf16.gmra.mxu0 %v585
    %v598 = vpop.f32.mrf.mxu0
    %v599 = vadd.f32 0.0, %v598
    %v600 = vpop.f32.mrf.mxu0
    %v601 = vadd.f32 0.0, %v600
    %602 = vmatmul.bf16.gmra.mxu0 %v586
    %v603 = vpop.f32.mrf.mxu0
    %v604 = vadd.f32 0.0, %v603
    %v605 = vpop.f32.mrf.mxu0
    %v606 = vadd.f32 0.0, %v605
    %607 = vdwg.mxu0
    %v608 = vpack.c.bf16 %v601, %v599
    %v609 = vpack.c.bf16 %v606, %v604
    %v610 = vld [vmem:[#allocation8] sm:$0xf]
    %v611 = vld [vmem:[#allocation8 + $0x4] sm:$0xf]
    %v612 = vld [vmem:[#allocation8 + $0x8] sm:$0xf]
    %v613 = vld [vmem:[#allocation8 + $0xc] sm:$0xf]
    %v614 = vld [vmem:[#allocation8 + $0x10] sm:$0xf]
    %v615 = vld [vmem:[#allocation8 + $0x14] sm:$0xf]
    %v616 = vld [vmem:[#allocation8 + $0x18] sm:$0xf]
    %v617 = vld [vmem:[#allocation8 + $0x1c] sm:$0xf]
    %v618 = vld [vmem:[#allocation8 + $0x20] sm:$0xf]
    %v619 = vld [vmem:[#allocation8 + $0x24] sm:$0xf]
    %v620 = vld [vmem:[#allocation8 + $0x28] sm:$0xf]
    %v621 = vld [vmem:[#allocation8 + $0x2c] sm:$0xf]
    %v622 = vld [vmem:[#allocation8 + $0x30] sm:$0xf]
    %v623 = vld [vmem:[#allocation8 + $0x34] sm:$0xf]
    %v624 = vld [vmem:[#allocation8 + $0x38] sm:$0xf]
    %v625 = vld [vmem:[#allocation8 + $0x3c] sm:$0xf]
    %s626 = scalar_lea.vmem [#allocation7], 16
    %v627 = vld [vmem:[%s626] sm:$0xf]
    %v628 = vld [vmem:[%s626 + $0x4] sm:$0xf]
    %v629 = vld [vmem:[%s626 + $0x8] sm:$0xf]
    %v630 = vld [vmem:[%s626 + $0xc] sm:$0xf]
    %v635 = vunpack.c.l.b16 %v627
    %v636 = vunpack.c.l.b16 %v628
    %v637 = vunpack.c.l.b16 %v629
    %v638 = vunpack.c.l.b16 %v630
    %v639 = vpack.c.b16 %v636, %v635
    %v640 = vpack.c.b16 %v638, %v637
    %643 = vmatpush.bf16.msra.mxu0 %v572
    %644 = vmatpush.bf16.msra.mxu0 %v571
    %645 = vmatpush.bf16.msra.mxu0 %v570
    %646 = vmatpush.bf16.msra.mxu0 %v569
    %647 = vmatpush.bf16.msra.mxu0 %v568
    %648 = vmatpush.bf16.msra.mxu0 %v567
    %649 = vmatpush.bf16.msra.mxu0 %v566
    %650 = vmatpush.bf16.msra.mxu0 %v565
    %651 = vmatmul.bf16.gmra.mxu0 %v639
    %v652 = vpop.f32.mrf.mxu0
    %v653 = vadd.f32 0.0, %v652
    %v654 = vpop.f32.mrf.mxu0
    %v655 = vadd.f32 0.0, %v654
    %656 = vmatmul.bf16.gmra.mxu0 %v640
    %v657 = vpop.f32.mrf.mxu0
    %v658 = vadd.f32 0.0, %v657
    %v659 = vpop.f32.mrf.mxu0
    %v660 = vadd.f32 0.0, %v659
    %661 = vdwg.mxu0
    %v662 = vpack.c.bf16 %v655, %v653
    %v663 = vpack.c.bf16 %v660, %v658
    %s664 = scalar_lea.vmem [#allocation8], 64
    %v665 = vld [vmem:[%s664] sm:$0xf]
    %v666 = vld [vmem:[%s664 + $0x4] sm:$0xf]
    %v667 = vld [vmem:[%s664 + $0x8] sm:$0xf]
    %v668 = vld [vmem:[%s664 + $0xc] sm:$0xf]
    %v669 = vld [vmem:[%s664 + $0x10] sm:$0xf]
    %v670 = vld [vmem:[%s664 + $0x14] sm:$0xf]
    %v671 = vld [vmem:[%s664 + $0x18] sm:$0xf]
    %v672 = vld [vmem:[%s664 + $0x1c] sm:$0xf]
    %v673 = vld [vmem:[%s664 + $0x20] sm:$0xf]
    %v674 = vld [vmem:[%s664 + $0x24] sm:$0xf]
    %v675 = vld [vmem:[%s664 + $0x28] sm:$0xf]
    %v676 = vld [vmem:[%s664 + $0x2c] sm:$0xf]
    %v677 = vld [vmem:[%s664 + $0x30] sm:$0xf]
    %v678 = vld [vmem:[%s664 + $0x34] sm:$0xf]
    %v679 = vld [vmem:[%s664 + $0x38] sm:$0xf]
    %v680 = vld [vmem:[%s664 + $0x3c] sm:$0xf]
    %v697 = vunpack.c.l.b16 %v665
    %v698 = vunpack.c.l.b16 %v666
    %v699 = vunpack.c.l.b16 %v667
    %v700 = vunpack.c.l.b16 %v668
    %v701 = vunpack.c.l.b16 %v669
    %v702 = vunpack.c.l.b16 %v670
    %v703 = vunpack.c.l.b16 %v671
    %v704 = vunpack.c.l.b16 %v672
    %v705 = vunpack.c.l.b16 %v673
    %v706 = vunpack.c.l.b16 %v674
    %v707 = vunpack.c.l.b16 %v675
    %v708 = vunpack.c.l.b16 %v676
    %v709 = vunpack.c.l.b16 %v677
    %v710 = vunpack.c.l.b16 %v678
    %v711 = vunpack.c.l.b16 %v679
    %v712 = vunpack.c.l.b16 %v680
    %v713 = vpack.c.b16 %v698, %v697
    %v714 = vpack.c.b16 %v700, %v699
    %v715 = vpack.c.b16 %v702, %v701
    %v716 = vpack.c.b16 %v704, %v703
    %v717 = vpack.c.b16 %v706, %v705
    %v718 = vpack.c.b16 %v708, %v707
    %v719 = vpack.c.b16 %v710, %v709
    %v720 = vpack.c.b16 %v712, %v711
    %729 = vmatpush.bf16.msra.mxu0 %v720
    %730 = vmatpush.bf16.msra.mxu0 %v719
    %731 = vmatpush.bf16.msra.mxu0 %v718
    %732 = vmatpush.bf16.msra.mxu0 %v717
    %733 = vmatpush.bf16.msra.mxu0 %v716
    %734 = vmatpush.bf16.msra.mxu0 %v715
    %735 = vmatpush.bf16.msra.mxu0 %v714
    %736 = vmatpush.bf16.msra.mxu0 %v713
    %737 = vmatmul.bf16.gmra.mxu0 %v662
    %v738 = vpop.f32.mrf.mxu0
    %v739 = vadd.f32 0.0, %v738
    %v740 = vpop.f32.mrf.mxu0
    %v741 = vadd.f32 0.0, %v740
    %742 = vmatmul.bf16.gmra.mxu0 %v663
    %v743 = vpop.f32.mrf.mxu0
    %v744 = vadd.f32 0.0, %v743
    %v745 = vpop.f32.mrf.mxu0
    %v746 = vadd.f32 0.0, %v745
    %747 = vdwg.mxu0
    %v764 = vunpack.c.l.b16 %v610
    %v765 = vunpack.c.l.b16 %v611
    %v766 = vunpack.c.l.b16 %v612
    %v767 = vunpack.c.l.b16 %v613
    %v768 = vunpack.c.l.b16 %v614
    %v769 = vunpack.c.l.b16 %v615
    %v770 = vunpack.c.l.b16 %v616
    %v771 = vunpack.c.l.b16 %v617
    %v772 = vunpack.c.l.b16 %v618
    %v773 = vunpack.c.l.b16 %v619
    %v774 = vunpack.c.l.b16 %v620
    %v775 = vunpack.c.l.b16 %v621
    %v776 = vunpack.c.l.b16 %v622
    %v777 = vunpack.c.l.b16 %v623
    %v778 = vunpack.c.l.b16 %v624
    %v779 = vunpack.c.l.b16 %v625
    %v780 = vpack.c.b16 %v765, %v764
    %v781 = vpack.c.b16 %v767, %v766
    %v782 = vpack.c.b16 %v769, %v768
    %v783 = vpack.c.b16 %v771, %v770
    %v784 = vpack.c.b16 %v773, %v772
    %v785 = vpack.c.b16 %v775, %v774
    %v786 = vpack.c.b16 %v777, %v776
    %v787 = vpack.c.b16 %v779, %v778
    %796 = vmatpush.bf16.msra.mxu0 %v787
    %797 = vmatpush.bf16.msra.mxu0 %v786
    %798 = vmatpush.bf16.msra.mxu0 %v785
    %799 = vmatpush.bf16.msra.mxu0 %v784
    %800 = vmatpush.bf16.msra.mxu0 %v783
    %801 = vmatpush.bf16.msra.mxu0 %v782
    %802 = vmatpush.bf16.msra.mxu0 %v781
    %803 = vmatpush.bf16.msra.mxu0 %v780
    %804 = vmatmul.bf16.gmra.mxu0 %v608
    %v805 = vpop.f32.mrf.mxu0
    %v806 = vadd.f32 %v739, %v805
    %v807 = vpop.f32.mrf.mxu0
    %v808 = vadd.f32 %v741, %v807
    %809 = vmatmul.bf16.gmra.mxu0 %v609
    %v810 = vpop.f32.mrf.mxu0
    %v811 = vadd.f32 %v744, %v810
    %v812 = vpop.f32.mrf.mxu0
    %v813 = vadd.f32 %v746, %v812
    %814 = vdwg.mxu0
    %s815 = scalar_lea.vmem [#allocation7], 32
    %v816 = vld [vmem:[%s815] sm:$0xf]
    %v817 = vld [vmem:[%s815 + $0x4] sm:$0xf]
    %v818 = vld [vmem:[%s815 + $0x8] sm:$0xf]
    %v819 = vld [vmem:[%s815 + $0xc] sm:$0xf]
    %v824 = vunpack.c.l.b16 %v816
    %v825 = vunpack.c.l.b16 %v817
    %v826 = vunpack.c.l.b16 %v818
    %v827 = vunpack.c.l.b16 %v819
    %v828 = vpack.c.b16 %v825, %v824
    %v829 = vpack.c.b16 %v827, %v826
    %832 = vmatpush.bf16.msra.mxu0 %v572
    %833 = vmatpush.bf16.msra.mxu0 %v571
    %834 = vmatpush.bf16.msra.mxu0 %v570
    %835 = vmatpush.bf16.msra.mxu0 %v569
    %836 = vmatpush.bf16.msra.mxu0 %v568
    %837 = vmatpush.bf16.msra.mxu0 %v567
    %838 = vmatpush.bf16.msra.mxu0 %v566
    %839 = vmatpush.bf16.msra.mxu0 %v565
    %840 = vmatmul.bf16.gmra.mxu0 %v828
    %v841 = vpop.f32.mrf.mxu0
    %v842 = vadd.f32 0.0, %v841
    %v843 = vpop.f32.mrf.mxu0
    %v844 = vadd.f32 0.0, %v843
    %845 = vmatmul.bf16.gmra.mxu0 %v829
    %v846 = vpop.f32.mrf.mxu0
    %v847 = vadd.f32 0.0, %v846
    %v848 = vpop.f32.mrf.mxu0
    %v849 = vadd.f32 0.0, %v848
    %850 = vdwg.mxu0
    %v851 = vpack.c.bf16 %v844, %v842
    %v852 = vpack.c.bf16 %v849, %v847
    %s853 = scalar_lea.vmem [#allocation8], 128
    %v854 = vld [vmem:[%s853] sm:$0xf]
    %v855 = vld [vmem:[%s853 + $0x4] sm:$0xf]
    %v856 = vld [vmem:[%s853 + $0x8] sm:$0xf]
    %v857 = vld [vmem:[%s853 + $0xc] sm:$0xf]
    %v858 = vld [vmem:[%s853 + $0x10] sm:$0xf]
    %v859 = vld [vmem:[%s853 + $0x14] sm:$0xf]
    %v860 = vld [vmem:[%s853 + $0x18] sm:$0xf]
    %v861 = vld [vmem:[%s853 + $0x1c] sm:$0xf]
    %v862 = vld [vmem:[%s853 + $0x20] sm:$0xf]
    %v863 = vld [vmem:[%s853 + $0x24] sm:$0xf]
    %v864 = vld [vmem:[%s853 + $0x28] sm:$0xf]
    %v865 = vld [vmem:[%s853 + $0x2c] sm:$0xf]
    %v866 = vld [vmem:[%s853 + $0x30] sm:$0xf]
    %v867 = vld [vmem:[%s853 + $0x34] sm:$0xf]
    %v868 = vld [vmem:[%s853 + $0x38] sm:$0xf]
    %v869 = vld [vmem:[%s853 + $0x3c] sm:$0xf]
    %v886 = vunpack.c.l.b16 %v854
    %v887 = vunpack.c.l.b16 %v855
    %v888 = vunpack.c.l.b16 %v856
    %v889 = vunpack.c.l.b16 %v857
    %v890 = vunpack.c.l.b16 %v858
    %v891 = vunpack.c.l.b16 %v859
    %v892 = vunpack.c.l.b16 %v860
    %v893 = vunpack.c.l.b16 %v861
    %v894 = vunpack.c.l.b16 %v862
    %v895 = vunpack.c.l.b16 %v863
    %v896 = vunpack.c.l.b16 %v864
    %v897 = vunpack.c.l.b16 %v865
    %v898 = vunpack.c.l.b16 %v866
    %v899 = vunpack.c.l.b16 %v867
    %v900 = vunpack.c.l.b16 %v868
    %v901 = vunpack.c.l.b16 %v869
    %v902 = vpack.c.b16 %v887, %v886
    %v903 = vpack.c.b16 %v889, %v888
    %v904 = vpack.c.b16 %v891, %v890
    %v905 = vpack.c.b16 %v893, %v892
    %v906 = vpack.c.b16 %v895, %v894
    %v907 = vpack.c.b16 %v897, %v896
    %v908 = vpack.c.b16 %v899, %v898
    %v909 = vpack.c.b16 %v901, %v900
    %918 = vmatpush.bf16.msra.mxu0 %v909
    %919 = vmatpush.bf16.msra.mxu0 %v908
    %920 = vmatpush.bf16.msra.mxu0 %v907
    %921 = vmatpush.bf16.msra.mxu0 %v906
    %922 = vmatpush.bf16.msra.mxu0 %v905
    %923 = vmatpush.bf16.msra.mxu0 %v904
    %924 = vmatpush.bf16.msra.mxu0 %v903
    %925 = vmatpush.bf16.msra.mxu0 %v902
    %926 = vmatmul.bf16.gmra.mxu0 %v851
    %v927 = vpop.f32.mrf.mxu0
    %v928 = vadd.f32 0.0, %v927
    %v929 = vpop.f32.mrf.mxu0
    %v930 = vadd.f32 0.0, %v929
    %931 = vmatmul.bf16.gmra.mxu0 %v852
    %v932 = vpop.f32.mrf.mxu0
    %v933 = vadd.f32 0.0, %v932
    %v934 = vpop.f32.mrf.mxu0
    %v935 = vadd.f32 0.0, %v934
    %936 = vdwg.mxu0
    %v937 = vadd.f32 %v806, %v928
    %v938 = vadd.f32 %v808, %v930
    %v939 = vadd.f32 %v811, %v933
    %v940 = vadd.f32 %v813, %v935
    %s941 = scalar_lea.vmem [#allocation7], 48
    %v942 = vld [vmem:[%s941] sm:$0xf]
    %v943 = vld [vmem:[%s941 + $0x4] sm:$0xf]
    %v944 = vld [vmem:[%s941 + $0x8] sm:$0xf]
    %v945 = vld [vmem:[%s941 + $0xc] sm:$0xf]
    %v950 = vunpack.c.l.b16 %v942
    %v951 = vunpack.c.l.b16 %v943
    %v952 = vunpack.c.l.b16 %v944
    %v953 = vunpack.c.l.b16 %v945
    %v954 = vpack.c.b16 %v951, %v950
    %v955 = vpack.c.b16 %v953, %v952
    %958 = vmatpush.bf16.msra.mxu0 %v572
    %959 = vmatpush.bf16.msra.mxu0 %v571
    %960 = vmatpush.bf16.msra.mxu0 %v570
    %961 = vmatpush.bf16.msra.mxu0 %v569
    %962 = vmatpush.bf16.msra.mxu0 %v568
    %963 = vmatpush.bf16.msra.mxu0 %v567
    %964 = vmatpush.bf16.msra.mxu0 %v566
    %965 = vmatpush.bf16.msra.mxu0 %v565
    %966 = vmatmul.bf16.gmra.mxu0 %v954
    %v967 = vpop.f32.mrf.mxu0
    %v968 = vadd.f32 0.0, %v967
    %v969 = vpop.f32.mrf.mxu0
    %v970 = vadd.f32 0.0, %v969
    %971 = vmatmul.bf16.gmra.mxu0 %v955
    %v972 = vpop.f32.mrf.mxu0
    %v973 = vadd.f32 0.0, %v972
    %v974 = vpop.f32.mrf.mxu0
    %v975 = vadd.f32 0.0, %v974
    %976 = vdwg.mxu0
    %v977 = vpack.c.bf16 %v970, %v968
    %v978 = vpack.c.bf16 %v975, %v973
    %s979 = scalar_lea.vmem [#allocation8], 192
    %v980 = vld [vmem:[%s979] sm:$0xf]
    %v981 = vld [vmem:[%s979 + $0x4] sm:$0xf]
    %v982 = vld [vmem:[%s979 + $0x8] sm:$0xf]
    %v983 = vld [vmem:[%s979 + $0xc] sm:$0xf]
    %v984 = vld [vmem:[%s979 + $0x10] sm:$0xf]
    %v985 = vld [vmem:[%s979 + $0x14] sm:$0xf]
    %v986 = vld [vmem:[%s979 + $0x18] sm:$0xf]
    %v987 = vld [vmem:[%s979 + $0x1c] sm:$0xf]
    %v988 = vld [vmem:[%s979 + $0x20] sm:$0xf]
    %v989 = vld [vmem:[%s979 + $0x24] sm:$0xf]
    %v990 = vld [vmem:[%s979 + $0x28] sm:$0xf]
    %v991 = vld [vmem:[%s979 + $0x2c] sm:$0xf]
    %v992 = vld [vmem:[%s979 + $0x30] sm:$0xf]
    %v993 = vld [vmem:[%s979 + $0x34] sm:$0xf]
    %v994 = vld [vmem:[%s979 + $0x38] sm:$0xf]
    %v995 = vld [vmem:[%s979 + $0x3c] sm:$0xf]
    %v1012 = vunpack.c.l.b16 %v980
    %v1013 = vunpack.c.l.b16 %v981
    %v1014 = vunpack.c.l.b16 %v982
    %v1015 = vunpack.c.l.b16 %v983
    %v1016 = vunpack.c.l.b16 %v984
    %v1017 = vunpack.c.l.b16 %v985
    %v1018 = vunpack.c.l.b16 %v986
    %v1019 = vunpack.c.l.b16 %v987
    %v1020 = vunpack.c.l.b16 %v988
    %v1021 = vunpack.c.l.b16 %v989
    %v1022 = vunpack.c.l.b16 %v990
    %v1023 = vunpack.c.l.b16 %v991
    %v1024 = vunpack.c.l.b16 %v992
    %v1025 = vunpack.c.l.b16 %v993
    %v1026 = vunpack.c.l.b16 %v994
    %v1027 = vunpack.c.l.b16 %v995
    %v1028 = vpack.c.b16 %v1013, %v1012
    %v1029 = vpack.c.b16 %v1015, %v1014
    %v1030 = vpack.c.b16 %v1017, %v1016
    %v1031 = vpack.c.b16 %v1019, %v1018
    %v1032 = vpack.c.b16 %v1021, %v1020
    %v1033 = vpack.c.b16 %v1023, %v1022
    %v1034 = vpack.c.b16 %v1025, %v1024
    %v1035 = vpack.c.b16 %v1027, %v1026
    %1044 = vmatpush.bf16.msra.mxu0 %v1035
    %1045 = vmatpush.bf16.msra.mxu0 %v1034
    %1046 = vmatpush.bf16.msra.mxu0 %v1033
    %1047 = vmatpush.bf16.msra.mxu0 %v1032
    %1048 = vmatpush.bf16.msra.mxu0 %v1031
    %1049 = vmatpush.bf16.msra.mxu0 %v1030
    %1050 = vmatpush.bf16.msra.mxu0 %v1029
    %1051 = vmatpush.bf16.msra.mxu0 %v1028
    %1052 = vmatmul.bf16.gmra.mxu0 %v977
    %v1053 = vpop.f32.mrf.mxu0
    %v1054 = vadd.f32 0.0, %v1053
    %v1055 = vpop.f32.mrf.mxu0
    %v1056 = vadd.f32 0.0, %v1055
    %1057 = vmatmul.bf16.gmra.mxu0 %v978
    %v1058 = vpop.f32.mrf.mxu0
    %v1059 = vadd.f32 0.0, %v1058
    %v1060 = vpop.f32.mrf.mxu0
    %v1061 = vadd.f32 0.0, %v1060
    %1062 = vdwg.mxu0
    %v1063 = vadd.f32 %v937, %v1054
    %v1064 = vadd.f32 %v938, %v1056
    %v1065 = vadd.f32 %v939, %v1059
    %v1066 = vadd.f32 %v940, %v1061
    %s1067 = scalar_lea.vmem [#allocation7], 64
    %v1068 = vld [vmem:[%s1067] sm:$0xf]
    %v1069 = vld [vmem:[%s1067 + $0x4] sm:$0xf]
    %v1070 = vld [vmem:[%s1067 + $0x8] sm:$0xf]
    %v1071 = vld [vmem:[%s1067 + $0xc] sm:$0xf]
    %v1076 = vunpack.c.l.b16 %v1068
    %v1077 = vunpack.c.l.b16 %v1069
    %v1078 = vunpack.c.l.b16 %v1070
    %v1079 = vunpack.c.l.b16 %v1071
    %v1080 = vpack.c.b16 %v1077, %v1076
    %v1081 = vpack.c.b16 %v1079, %v1078
    %1084 = vmatpush.bf16.msra.mxu0 %v572
    %1085 = vmatpush.bf16.msra.mxu0 %v571
    %1086 = vmatpush.bf16.msra.mxu0 %v570
    %1087 = vmatpush.bf16.msra.mxu0 %v569
    %1088 = vmatpush.bf16.msra.mxu0 %v568
    %1089 = vmatpush.bf16.msra.mxu0 %v567
    %1090 = vmatpush.bf16.msra.mxu0 %v566
    %1091 = vmatpush.bf16.msra.mxu0 %v565
    %1092 = vmatmul.bf16.gmra.mxu0 %v1080
    %v1093 = vpop.f32.mrf.mxu0
    %v1094 = vadd.f32 0.0, %v1093
    %v1095 = vpop.f32.mrf.mxu0
    %v1096 = vadd.f32 0.0, %v1095
    %1097 = vmatmul.bf16.gmra.mxu0 %v1081
    %v1098 = vpop.f32.mrf.mxu0
    %v1099 = vadd.f32 0.0, %v1098
    %v1100 = vpop.f32.mrf.mxu0
    %v1101 = vadd.f32 0.0, %v1100
    %1102 = vdwg.mxu0
    %v1103 = vpack.c.bf16 %v1096, %v1094
    %v1104 = vpack.c.bf16 %v1101, %v1099
    %s1105 = scalar_lea.vmem [#allocation8], 256
    %v1106 = vld [vmem:[%s1105] sm:$0xf]
    %v1107 = vld [vmem:[%s1105 + $0x4] sm:$0xf]
    %v1108 = vld [vmem:[%s1105 + $0x8] sm:$0xf]
    %v1109 = vld [vmem:[%s1105 + $0xc] sm:$0xf]
    %v1110 = vld [vmem:[%s1105 + $0x10] sm:$0xf]
    %v1111 = vld [vmem:[%s1105 + $0x14] sm:$0xf]
    %v1112 = vld [vmem:[%s1105 + $0x18] sm:$0xf]
    %v1113 = vld [vmem:[%s1105 + $0x1c] sm:$0xf]
    %v1114 = vld [vmem:[%s1105 + $0x20] sm:$0xf]
    %v1115 = vld [vmem:[%s1105 + $0x24] sm:$0xf]
    %v1116 = vld [vmem:[%s1105 + $0x28] sm:$0xf]
    %v1117 = vld [vmem:[%s1105 + $0x2c] sm:$0xf]
    %v1118 = vld [vmem:[%s1105 + $0x30] sm:$0xf]
    %v1119 = vld [vmem:[%s1105 + $0x34] sm:$0xf]
    %v1120 = vld [vmem:[%s1105 + $0x38] sm:$0xf]
    %v1121 = vld [vmem:[%s1105 + $0x3c] sm:$0xf]
    %v1138 = vunpack.c.l.b16 %v1106
    %v1139 = vunpack.c.l.b16 %v1107
    %v1140 = vunpack.c.l.b16 %v1108
    %v1141 = vunpack.c.l.b16 %v1109
    %v1142 = vunpack.c.l.b16 %v1110
    %v1143 = vunpack.c.l.b16 %v1111
    %v1144 = vunpack.c.l.b16 %v1112
    %v1145 = vunpack.c.l.b16 %v1113
    %v1146 = vunpack.c.l.b16 %v1114
    %v1147 = vunpack.c.l.b16 %v1115
    %v1148 = vunpack.c.l.b16 %v1116
    %v1149 = vunpack.c.l.b16 %v1117
    %v1150 = vunpack.c.l.b16 %v1118
    %v1151 = vunpack.c.l.b16 %v1119
    %v1152 = vunpack.c.l.b16 %v1120
    %v1153 = vunpack.c.l.b16 %v1121
    %v1154 = vpack.c.b16 %v1139, %v1138
    %v1155 = vpack.c.b16 %v1141, %v1140
    %v1156 = vpack.c.b16 %v1143, %v1142
    %v1157 = vpack.c.b16 %v1145, %v1144
    %v1158 = vpack.c.b16 %v1147, %v1146
    %v1159 = vpack.c.b16 %v1149, %v1148
    %v1160 = vpack.c.b16 %v1151, %v1150
    %v1161 = vpack.c.b16 %v1153, %v1152
    %1170 = vmatpush.bf16.msra.mxu0 %v1161
    %1171 = vmatpush.bf16.msra.mxu0 %v1160
    %1172 = vmatpush.bf16.msra.mxu0 %v1159
    %1173 = vmatpush.bf16.msra.mxu0 %v1158
    %1174 = vmatpush.bf16.msra.mxu0 %v1157
    %1175 = vmatpush.bf16.msra.mxu0 %v1156
    %1176 = vmatpush.bf16.msra.mxu0 %v1155
    %1177 = vmatpush.bf16.msra.mxu0 %v1154
    %1178 = vmatmul.bf16.gmra.mxu0 %v1103
    %v1179 = vpop.f32.mrf.mxu0
    %v1180 = vadd.f32 0.0, %v1179
    %v1181 = vpop.f32.mrf.mxu0
    %v1182 = vadd.f32 0.0, %v1181
    %1183 = vmatmul.bf16.gmra.mxu0 %v1104
    %v1184 = vpop.f32.mrf.mxu0
    %v1185 = vadd.f32 0.0, %v1184
    %v1186 = vpop.f32.mrf.mxu0
    %v1187 = vadd.f32 0.0, %v1186
    %1188 = vdwg.mxu0
    %v1189 = vadd.f32 %v1063, %v1180
    %v1190 = vadd.f32 %v1064, %v1182
    %v1191 = vadd.f32 %v1065, %v1185
    %v1192 = vadd.f32 %v1066, %v1187
    %s1193 = scalar_lea.vmem [#allocation7], 80
    %v1194 = vld [vmem:[%s1193] sm:$0xf]
    %v1195 = vld [vmem:[%s1193 + $0x4] sm:$0xf]
    %v1196 = vld [vmem:[%s1193 + $0x8] sm:$0xf]
    %v1197 = vld [vmem:[%s1193 + $0xc] sm:$0xf]
    %v1202 = vunpack.c.l.b16 %v1194
    %v1203 = vunpack.c.l.b16 %v1195
    %v1204 = vunpack.c.l.b16 %v1196
    %v1205 = vunpack.c.l.b16 %v1197
    %v1206 = vpack.c.b16 %v1203, %v1202
    %v1207 = vpack.c.b16 %v1205, %v1204
    %1210 = vmatpush.bf16.msra.mxu0 %v572
    %1211 = vmatpush.bf16.msra.mxu0 %v571
    %1212 = vmatpush.bf16.msra.mxu0 %v570
    %1213 = vmatpush.bf16.msra.mxu0 %v569
    %1214 = vmatpush.bf16.msra.mxu0 %v568
    %1215 = vmatpush.bf16.msra.mxu0 %v567
    %1216 = vmatpush.bf16.msra.mxu0 %v566
    %1217 = vmatpush.bf16.msra.mxu0 %v565
    %1218 = vmatmul.bf16.gmra.mxu0 %v1206
    %v1219 = vpop.f32.mrf.mxu0
    %v1220 = vadd.f32 0.0, %v1219
    %v1221 = vpop.f32.mrf.mxu0
    %v1222 = vadd.f32 0.0, %v1221
    %1223 = vmatmul.bf16.gmra.mxu0 %v1207
    %v1224 = vpop.f32.mrf.mxu0
    %v1225 = vadd.f32 0.0, %v1224
    %v1226 = vpop.f32.mrf.mxu0
    %v1227 = vadd.f32 0.0, %v1226
    %1228 = vdwg.mxu0
    %v1229 = vpack.c.bf16 %v1222, %v1220
    %v1230 = vpack.c.bf16 %v1227, %v1225
    %s1231 = scalar_lea.vmem [#allocation8], 320
    %v1232 = vld [vmem:[%s1231] sm:$0xf]
    %v1233 = vld [vmem:[%s1231 + $0x4] sm:$0xf]
    %v1234 = vld [vmem:[%s1231 + $0x8] sm:$0xf]
    %v1235 = vld [vmem:[%s1231 + $0xc] sm:$0xf]
    %v1236 = vld [vmem:[%s1231 + $0x10] sm:$0xf]
    %v1237 = vld [vmem:[%s1231 + $0x14] sm:$0xf]
    %v1238 = vld [vmem:[%s1231 + $0x18] sm:$0xf]
    %v1239 = vld [vmem:[%s1231 + $0x1c] sm:$0xf]
    %v1240 = vld [vmem:[%s1231 + $0x20] sm:$0xf]
    %v1241 = vld [vmem:[%s1231 + $0x24] sm:$0xf]
    %v1242 = vld [vmem:[%s1231 + $0x28] sm:$0xf]
    %v1243 = vld [vmem:[%s1231 + $0x2c] sm:$0xf]
    %v1244 = vld [vmem:[%s1231 + $0x30] sm:$0xf]
    %v1245 = vld [vmem:[%s1231 + $0x34] sm:$0xf]
    %v1246 = vld [vmem:[%s1231 + $0x38] sm:$0xf]
    %v1247 = vld [vmem:[%s1231 + $0x3c] sm:$0xf]
    %v1264 = vunpack.c.l.b16 %v1232
    %v1265 = vunpack.c.l.b16 %v1233
    %v1266 = vunpack.c.l.b16 %v1234
    %v1267 = vunpack.c.l.b16 %v1235
    %v1268 = vunpack.c.l.b16 %v1236
    %v1269 = vunpack.c.l.b16 %v1237
    %v1270 = vunpack.c.l.b16 %v1238
    %v1271 = vunpack.c.l.b16 %v1239
    %v1272 = vunpack.c.l.b16 %v1240
    %v1273 = vunpack.c.l.b16 %v1241
    %v1274 = vunpack.c.l.b16 %v1242
    %v1275 = vunpack.c.l.b16 %v1243
    %v1276 = vunpack.c.l.b16 %v1244
    %v1277 = vunpack.c.l.b16 %v1245
    %v1278 = vunpack.c.l.b16 %v1246
    %v1279 = vunpack.c.l.b16 %v1247
    %v1280 = vpack.c.b16 %v1265, %v1264
    %v1281 = vpack.c.b16 %v1267, %v1266
    %v1282 = vpack.c.b16 %v1269, %v1268
    %v1283 = vpack.c.b16 %v1271, %v1270
    %v1284 = vpack.c.b16 %v1273, %v1272
    %v1285 = vpack.c.b16 %v1275, %v1274
    %v1286 = vpack.c.b16 %v1277, %v1276
    %v1287 = vpack.c.b16 %v1279, %v1278
    %1296 = vmatpush.bf16.msra.mxu0 %v1287
    %1297 = vmatpush.bf16.msra.mxu0 %v1286
    %1298 = vmatpush.bf16.msra.mxu0 %v1285
    %1299 = vmatpush.bf16.msra.mxu0 %v1284
    %1300 = vmatpush.bf16.msra.mxu0 %v1283
    %1301 = vmatpush.bf16.msra.mxu0 %v1282
    %1302 = vmatpush.bf16.msra.mxu0 %v1281
    %1303 = vmatpush.bf16.msra.mxu0 %v1280
    %1304 = vmatmul.bf16.gmra.mxu0 %v1229
    %v1305 = vpop.f32.mrf.mxu0
    %v1306 = vadd.f32 0.0, %v1305
    %v1307 = vpop.f32.mrf.mxu0
    %v1308 = vadd.f32 0.0, %v1307
    %1309 = vmatmul.bf16.gmra.mxu0 %v1230
    %v1310 = vpop.f32.mrf.mxu0
    %v1311 = vadd.f32 0.0, %v1310
    %v1312 = vpop.f32.mrf.mxu0
    %v1313 = vadd.f32 0.0, %v1312
    %1314 = vdwg.mxu0
    %v1315 = vadd.f32 %v1189, %v1306
    %v1316 = vadd.f32 %v1190, %v1308
    %v1317 = vadd.f32 %v1191, %v1311
    %v1318 = vadd.f32 %v1192, %v1313
    %s1319 = scalar_lea.vmem [#allocation7], 96
    %v1320 = vld [vmem:[%s1319] sm:$0xf]
    %v1321 = vld [vmem:[%s1319 + $0x4] sm:$0xf]
    %v1322 = vld [vmem:[%s1319 + $0x8] sm:$0xf]
    %v1323 = vld [vmem:[%s1319 + $0xc] sm:$0xf]
    %v1328 = vunpack.c.l.b16 %v1320
    %v1329 = vunpack.c.l.b16 %v1321
    %v1330 = vunpack.c.l.b16 %v1322
    %v1331 = vunpack.c.l.b16 %v1323
    %v1332 = vpack.c.b16 %v1329, %v1328
    %v1333 = vpack.c.b16 %v1331, %v1330
    %1336 = vmatpush.bf16.msra.mxu0 %v572
    %1337 = vmatpush.bf16.msra.mxu0 %v571
    %1338 = vmatpush.bf16.msra.mxu0 %v570
    %1339 = vmatpush.bf16.msra.mxu0 %v569
    %1340 = vmatpush.bf16.msra.mxu0 %v568
    %1341 = vmatpush.bf16.msra.mxu0 %v567
    %1342 = vmatpush.bf16.msra.mxu0 %v566
    %1343 = vmatpush.bf16.msra.mxu0 %v565
    %1344 = vmatmul.bf16.gmra.mxu0 %v1332
    %v1345 = vpop.f32.mrf.mxu0
    %v1346 = vadd.f32 0.0, %v1345
    %v1347 = vpop.f32.mrf.mxu0
    %v1348 = vadd.f32 0.0, %v1347
    %1349 = vmatmul.bf16.gmra.mxu0 %v1333
    %v1350 = vpop.f32.mrf.mxu0
    %v1351 = vadd.f32 0.0, %v1350
    %v1352 = vpop.f32.mrf.mxu0
    %v1353 = vadd.f32 0.0, %v1352
    %1354 = vdwg.mxu0
    %v1355 = vpack.c.bf16 %v1348, %v1346
    %v1356 = vpack.c.bf16 %v1353, %v1351
    %s1357 = scalar_lea.vmem [#allocation8], 384
    %v1358 = vld [vmem:[%s1357] sm:$0xf]
    %v1359 = vld [vmem:[%s1357 + $0x4] sm:$0xf]
    %v1360 = vld [vmem:[%s1357 + $0x8] sm:$0xf]
    %v1361 = vld [vmem:[%s1357 + $0xc] sm:$0xf]
    %v1362 = vld [vmem:[%s1357 + $0x10] sm:$0xf]
    %v1363 = vld [vmem:[%s1357 + $0x14] sm:$0xf]
    %v1364 = vld [vmem:[%s1357 + $0x18] sm:$0xf]
    %v1365 = vld [vmem:[%s1357 + $0x1c] sm:$0xf]
    %v1366 = vld [vmem:[%s1357 + $0x20] sm:$0xf]
    %v1367 = vld [vmem:[%s1357 + $0x24] sm:$0xf]
    %v1368 = vld [vmem:[%s1357 + $0x28] sm:$0xf]
    %v1369 = vld [vmem:[%s1357 + $0x2c] sm:$0xf]
    %v1370 = vld [vmem:[%s1357 + $0x30] sm:$0xf]
    %v1371 = vld [vmem:[%s1357 + $0x34] sm:$0xf]
    %v1372 = vld [vmem:[%s1357 + $0x38] sm:$0xf]
    %v1373 = vld [vmem:[%s1357 + $0x3c] sm:$0xf]
    %v1390 = vunpack.c.l.b16 %v1358
    %v1391 = vunpack.c.l.b16 %v1359
    %v1392 = vunpack.c.l.b16 %v1360
    %v1393 = vunpack.c.l.b16 %v1361
    %v1394 = vunpack.c.l.b16 %v1362
    %v1395 = vunpack.c.l.b16 %v1363
    %v1396 = vunpack.c.l.b16 %v1364
    %v1397 = vunpack.c.l.b16 %v1365
    %v1398 = vunpack.c.l.b16 %v1366
    %v1399 = vunpack.c.l.b16 %v1367
    %v1400 = vunpack.c.l.b16 %v1368
    %v1401 = vunpack.c.l.b16 %v1369
    %v1402 = vunpack.c.l.b16 %v1370
    %v1403 = vunpack.c.l.b16 %v1371
    %v1404 = vunpack.c.l.b16 %v1372
    %v1405 = vunpack.c.l.b16 %v1373
    %v1406 = vpack.c.b16 %v1391, %v1390
    %v1407 = vpack.c.b16 %v1393, %v1392
    %v1408 = vpack.c.b16 %v1395, %v1394
    %v1409 = vpack.c.b16 %v1397, %v1396
    %v1410 = vpack.c.b16 %v1399, %v1398
    %v1411 = vpack.c.b16 %v1401, %v1400
    %v1412 = vpack.c.b16 %v1403, %v1402
    %v1413 = vpack.c.b16 %v1405, %v1404
    %1422 = vmatpush.bf16.msra.mxu0 %v1413
    %1423 = vmatpush.bf16.msra.mxu0 %v1412
    %1424 = vmatpush.bf16.msra.mxu0 %v1411
    %1425 = vmatpush.bf16.msra.mxu0 %v1410
    %1426 = vmatpush.bf16.msra.mxu0 %v1409
    %1427 = vmatpush.bf16.msra.mxu0 %v1408
    %1428 = vmatpush.bf16.msra.mxu0 %v1407
    %1429 = vmatpush.bf16.msra.mxu0 %v1406
    %1430 = vmatmul.bf16.gmra.mxu0 %v1355
    %v1431 = vpop.f32.mrf.mxu0
    %v1432 = vadd.f32 0.0, %v1431
    %v1433 = vpop.f32.mrf.mxu0
    %v1434 = vadd.f32 0.0, %v1433
    %1435 = vmatmul.bf16.gmra.mxu0 %v1356
    %v1436 = vpop.f32.mrf.mxu0
    %v1437 = vadd.f32 0.0, %v1436
    %v1438 = vpop.f32.mrf.mxu0
    %v1439 = vadd.f32 0.0, %v1438
    %1440 = vdwg.mxu0
    %v1441 = vadd.f32 %v1315, %v1432
    %v1442 = vadd.f32 %v1316, %v1434
    %v1443 = vadd.f32 %v1317, %v1437
    %v1444 = vadd.f32 %v1318, %v1439
    %s1445 = scalar_lea.vmem [#allocation7], 112
    %v1446 = vld [vmem:[%s1445] sm:$0xf]
    %v1447 = vld [vmem:[%s1445 + $0x4] sm:$0xf]
    %v1448 = vld [vmem:[%s1445 + $0x8] sm:$0xf]
    %v1449 = vld [vmem:[%s1445 + $0xc] sm:$0xf]
    %v1454 = vunpack.c.l.b16 %v1446
    %v1455 = vunpack.c.l.b16 %v1447
    %v1456 = vunpack.c.l.b16 %v1448
    %v1457 = vunpack.c.l.b16 %v1449
    %v1458 = vpack.c.b16 %v1455, %v1454
    %v1459 = vpack.c.b16 %v1457, %v1456
    %1462 = vmatpush.bf16.msra.mxu0 %v572
    %1463 = vmatpush.bf16.msra.mxu0 %v571
    %1464 = vmatpush.bf16.msra.mxu0 %v570
    %1465 = vmatpush.bf16.msra.mxu0 %v569
    %1466 = vmatpush.bf16.msra.mxu0 %v568
    %1467 = vmatpush.bf16.msra.mxu0 %v567
    %1468 = vmatpush.bf16.msra.mxu0 %v566
    %1469 = vmatpush.bf16.msra.mxu0 %v565
    %1470 = vmatmul.bf16.gmra.mxu0 %v1458
    %v1471 = vpop.f32.mrf.mxu0
    %v1472 = vadd.f32 0.0, %v1471
    %v1473 = vpop.f32.mrf.mxu0
    %v1474 = vadd.f32 0.0, %v1473
    %1475 = vmatmul.bf16.gmra.mxu0 %v1459
    %v1476 = vpop.f32.mrf.mxu0
    %v1477 = vadd.f32 0.0, %v1476
    %v1478 = vpop.f32.mrf.mxu0
    %v1479 = vadd.f32 0.0, %v1478
    %1480 = vdwg.mxu0
    %v1481 = vpack.c.bf16 %v1474, %v1472
    %v1482 = vpack.c.bf16 %v1479, %v1477
    %s1483 = scalar_lea.vmem [#allocation8], 448
    %v1484 = vld [vmem:[%s1483] sm:$0xf]
    %v1485 = vld [vmem:[%s1483 + $0x4] sm:$0xf]
    %v1486 = vld [vmem:[%s1483 + $0x8] sm:$0xf]
    %v1487 = vld [vmem:[%s1483 + $0xc] sm:$0xf]
    %v1488 = vld [vmem:[%s1483 + $0x10] sm:$0xf]
    %v1489 = vld [vmem:[%s1483 + $0x14] sm:$0xf]
    %v1490 = vld [vmem:[%s1483 + $0x18] sm:$0xf]
    %v1491 = vld [vmem:[%s1483 + $0x1c] sm:$0xf]
    %v1492 = vld [vmem:[%s1483 + $0x20] sm:$0xf]
    %v1493 = vld [vmem:[%s1483 + $0x24] sm:$0xf]
    %v1494 = vld [vmem:[%s1483 + $0x28] sm:$0xf]
    %v1495 = vld [vmem:[%s1483 + $0x2c] sm:$0xf]
    %v1496 = vld [vmem:[%s1483 + $0x30] sm:$0xf]
    %v1497 = vld [vmem:[%s1483 + $0x34] sm:$0xf]
    %v1498 = vld [vmem:[%s1483 + $0x38] sm:$0xf]
    %v1499 = vld [vmem:[%s1483 + $0x3c] sm:$0xf]
    %v1516 = vunpack.c.l.b16 %v1484
    %v1517 = vunpack.c.l.b16 %v1485
    %v1518 = vunpack.c.l.b16 %v1486
    %v1519 = vunpack.c.l.b16 %v1487
    %v1520 = vunpack.c.l.b16 %v1488
    %v1521 = vunpack.c.l.b16 %v1489
    %v1522 = vunpack.c.l.b16 %v1490
    %v1523 = vunpack.c.l.b16 %v1491
    %v1524 = vunpack.c.l.b16 %v1492
    %v1525 = vunpack.c.l.b16 %v1493
    %v1526 = vunpack.c.l.b16 %v1494
    %v1527 = vunpack.c.l.b16 %v1495
    %v1528 = vunpack.c.l.b16 %v1496
    %v1529 = vunpack.c.l.b16 %v1497
    %v1530 = vunpack.c.l.b16 %v1498
    %v1531 = vunpack.c.l.b16 %v1499
    %v1532 = vpack.c.b16 %v1517, %v1516
    %v1533 = vpack.c.b16 %v1519, %v1518
    %v1534 = vpack.c.b16 %v1521, %v1520
    %v1535 = vpack.c.b16 %v1523, %v1522
    %v1536 = vpack.c.b16 %v1525, %v1524
    %v1537 = vpack.c.b16 %v1527, %v1526
    %v1538 = vpack.c.b16 %v1529, %v1528
    %v1539 = vpack.c.b16 %v1531, %v1530
    %1548 = vmatpush.bf16.msra.mxu0 %v1539
    %1549 = vmatpush.bf16.msra.mxu0 %v1538
    %1550 = vmatpush.bf16.msra.mxu0 %v1537
    %1551 = vmatpush.bf16.msra.mxu0 %v1536
    %1552 = vmatpush.bf16.msra.mxu0 %v1535
    %1553 = vmatpush.bf16.msra.mxu0 %v1534
    %1554 = vmatpush.bf16.msra.mxu0 %v1533
    %1555 = vmatpush.bf16.msra.mxu0 %v1532
    %1556 = vmatmul.bf16.gmra.mxu0 %v1481
    %v1557 = vpop.f32.mrf.mxu0
    %v1558 = vadd.f32 0.0, %v1557
    %v1559 = vpop.f32.mrf.mxu0
    %v1560 = vadd.f32 0.0, %v1559
    %1561 = vmatmul.bf16.gmra.mxu0 %v1482
    %v1562 = vpop.f32.mrf.mxu0
    %v1563 = vadd.f32 0.0, %v1562
    %v1564 = vpop.f32.mrf.mxu0
    %v1565 = vadd.f32 0.0, %v1564
    %1566 = vdwg.mxu0
    %v1567 = vadd.f32 %v1441, %v1558
    %v1568 = vadd.f32 %v1442, %v1560
    %v1569 = vadd.f32 %v1443, %v1563
    %v1570 = vadd.f32 %v1444, %v1565
    %s1571 = scalar_lea.vmem [#allocation7], 128
    %v1572 = vld [vmem:[%s1571] sm:$0xf]
    %v1573 = vld [vmem:[%s1571 + $0x4] sm:$0xf]
    %v1574 = vld [vmem:[%s1571 + $0x8] sm:$0xf]
    %v1575 = vld [vmem:[%s1571 + $0xc] sm:$0xf]
    %v1580 = vunpack.c.l.b16 %v1572
    %v1581 = vunpack.c.l.b16 %v1573
    %v1582 = vunpack.c.l.b16 %v1574
    %v1583 = vunpack.c.l.b16 %v1575
    %v1584 = vpack.c.b16 %v1581, %v1580
    %v1585 = vpack.c.b16 %v1583, %v1582
    %1588 = vmatpush.bf16.msra.mxu0 %v572
    %1589 = vmatpush.bf16.msra.mxu0 %v571
    %1590 = vmatpush.bf16.msra.mxu0 %v570
    %1591 = vmatpush.bf16.msra.mxu0 %v569
    %1592 = vmatpush.bf16.msra.mxu0 %v568
    %1593 = vmatpush.bf16.msra.mxu0 %v567
    %1594 = vmatpush.bf16.msra.mxu0 %v566
    %1595 = vmatpush.bf16.msra.mxu0 %v565
    %1596 = vmatmul.bf16.gmra.mxu0 %v1584
    %v1597 = vpop.f32.mrf.mxu0
    %v1598 = vadd.f32 0.0, %v1597
    %v1599 = vpop.f32.mrf.mxu0
    %v1600 = vadd.f32 0.0, %v1599
    %1601 = vmatmul.bf16.gmra.mxu0 %v1585
    %v1602 = vpop.f32.mrf.mxu0
    %v1603 = vadd.f32 0.0, %v1602
    %v1604 = vpop.f32.mrf.mxu0
    %v1605 = vadd.f32 0.0, %v1604
    %1606 = vdwg.mxu0
    %v1607 = vpack.c.bf16 %v1600, %v1598
    %v1608 = vpack.c.bf16 %v1605, %v1603
    %s1609 = scalar_lea.vmem [#allocation8], 512
    %v1610 = vld [vmem:[%s1609] sm:$0xf]
    %v1611 = vld [vmem:[%s1609 + $0x4] sm:$0xf]
    %v1612 = vld [vmem:[%s1609 + $0x8] sm:$0xf]
    %v1613 = vld [vmem:[%s1609 + $0xc] sm:$0xf]
    %v1614 = vld [vmem:[%s1609 + $0x10] sm:$0xf]
    %v1615 = vld [vmem:[%s1609 + $0x14] sm:$0xf]
    %v1616 = vld [vmem:[%s1609 + $0x18] sm:$0xf]
    %v1617 = vld [vmem:[%s1609 + $0x1c] sm:$0xf]
    %v1618 = vld [vmem:[%s1609 + $0x20] sm:$0xf]
    %v1619 = vld [vmem:[%s1609 + $0x24] sm:$0xf]
    %v1620 = vld [vmem:[%s1609 + $0x28] sm:$0xf]
    %v1621 = vld [vmem:[%s1609 + $0x2c] sm:$0xf]
    %v1622 = vld [vmem:[%s1609 + $0x30] sm:$0xf]
    %v1623 = vld [vmem:[%s1609 + $0x34] sm:$0xf]
    %v1624 = vld [vmem:[%s1609 + $0x38] sm:$0xf]
    %v1625 = vld [vmem:[%s1609 + $0x3c] sm:$0xf]
    %v1642 = vunpack.c.l.b16 %v1610
    %v1643 = vunpack.c.l.b16 %v1611
    %v1644 = vunpack.c.l.b16 %v1612
    %v1645 = vunpack.c.l.b16 %v1613
    %v1646 = vunpack.c.l.b16 %v1614
    %v1647 = vunpack.c.l.b16 %v1615
    %v1648 = vunpack.c.l.b16 %v1616
    %v1649 = vunpack.c.l.b16 %v1617
    %v1650 = vunpack.c.l.b16 %v1618
    %v1651 = vunpack.c.l.b16 %v1619
    %v1652 = vunpack.c.l.b16 %v1620
    %v1653 = vunpack.c.l.b16 %v1621
    %v1654 = vunpack.c.l.b16 %v1622
    %v1655 = vunpack.c.l.b16 %v1623
    %v1656 = vunpack.c.l.b16 %v1624
    %v1657 = vunpack.c.l.b16 %v1625
    %v1658 = vpack.c.b16 %v1643, %v1642
    %v1659 = vpack.c.b16 %v1645, %v1644
    %v1660 = vpack.c.b16 %v1647, %v1646
    %v1661 = vpack.c.b16 %v1649, %v1648
    %v1662 = vpack.c.b16 %v1651, %v1650
    %v1663 = vpack.c.b16 %v1653, %v1652
    %v1664 = vpack.c.b16 %v1655, %v1654
    %v1665 = vpack.c.b16 %v1657, %v1656
    %1674 = vmatpush.bf16.msra.mxu0 %v1665
    %1675 = vmatpush.bf16.msra.mxu0 %v1664
    %1676 = vmatpush.bf16.msra.mxu0 %v1663
    %1677 = vmatpush.bf16.msra.mxu0 %v1662
    %1678 = vmatpush.bf16.msra.mxu0 %v1661
    %1679 = vmatpush.bf16.msra.mxu0 %v1660
    %1680 = vmatpush.bf16.msra.mxu0 %v1659
    %1681 = vmatpush.bf16.msra.mxu0 %v1658
    %1682 = vmatmul.bf16.gmra.mxu0 %v1607
    %v1683 = vpop.f32.mrf.mxu0
    %v1684 = vadd.f32 0.0, %v1683
    %v1685 = vpop.f32.mrf.mxu0
    %v1686 = vadd.f32 0.0, %v1685
    %1687 = vmatmul.bf16.gmra.mxu0 %v1608
    %v1688 = vpop.f32.mrf.mxu0
    %v1689 = vadd.f32 0.0, %v1688
    %v1690 = vpop.f32.mrf.mxu0
    %v1691 = vadd.f32 0.0, %v1690
    %1692 = vdwg.mxu0
    %v1693 = vadd.f32 %v1567, %v1684
    %v1694 = vadd.f32 %v1568, %v1686
    %v1695 = vadd.f32 %v1569, %v1689
    %v1696 = vadd.f32 %v1570, %v1691
    %v1697 = vld [vmem:[%s6] sm:$0x1]
    %v1698 = vld [vmem:[%s7] sm:$0x1]
    %v1699 = vadd.f32 %v1693, %v1694
    %v1700 = vadd.f32 %v1699, %v1695
    %v1701 = vadd.f32 %v1700, %v1696
    %v1702 = vrot.slane %v1701, 4
    %v1703 = vadd.f32 %v1701, %v1702
    %v1704 = vrot.slane %v1703, 2
    %v1705 = vadd.f32 %v1703, %v1704
    %v1706 = vrot.slane %v1705, 1
    %v1707 = vadd.f32 %v1705, %v1706
    %v1708 = vrcp.pop 32.0
    %v1709 = vmul.f32 32.0, %v1708
    %v1710 = vsub.f32 1.0, %v1709
    %v1711 = vmul.f32 %v1708, %v1710
    %v1712 = vadd.f32 %v1708, %v1711
    %vm1713 = vweird.f32 %v1708
    %v1714 = vsel %vm1713, %v1708, %v1712
    %v1715 = vmul.f32 %v1707, %v1714
    %v1716 = vsub.f32 %v1693, %v1715
    %v1717 = vsub.f32 %v1694, %v1715
    %v1718 = vsub.f32 %v1695, %v1715
    %v1719 = vsub.f32 %v1696, %v1715
    %v1720 = vmul.f32 %v1716, %v1716
    %v1721 = vmul.f32 %v1717, %v1717
    %v1722 = vmul.f32 %v1718, %v1718
    %v1723 = vmul.f32 %v1719, %v1719
    %v1724 = vadd.f32 %v1720, %v1721
    %v1725 = vadd.f32 %v1724, %v1722
    %v1726 = vadd.f32 %v1725, %v1723
    %v1727 = vrot.slane %v1726, 4
    %v1728 = vadd.f32 %v1726, %v1727
    %v1729 = vrot.slane %v1728, 2
    %v1730 = vadd.f32 %v1728, %v1729
    %v1731 = vrot.slane %v1730, 1
    %v1732 = vadd.f32 %v1730, %v1731
    %v1733 = vmul.f32 %v1732, %v1714
    %v1734 = vadd.f32 %v1733, 1e-05
    %v1735 = vrsqrt.pop %v1734
    %v1736 = vmul.f32 %v1735, %v1734
    %v1737 = vmul.f32 %v1736, %v1735
    %v1738 = vmul.f32 0.5, %v1737
    %v1739 = vsub.f32 1.5, %v1738
    %v1740 = vmul.f32 %v1735, %v1739
    %vm1741 = vweird.f32 %v1734
    %vm1742 = vweird.f32 %v1735
    %vm1743 = vmor %vm1741, %vm1742
    %v1744 = vsel %vm1743, %v1735, %v1740
    %v1745 = vmul.f32 %v1744, %v1697
    %v1746 = vperm.slane %v1745, 0
    %v1747 = vmul.f32 %v1693, %v1746
    %v1748 = vmul.f32 %v1694, %v1746
    %v1749 = vmul.f32 %v1695, %v1746
    %v1750 = vmul.f32 %v1696, %v1746
    %v1751 = vmul.f32 %v1715, %v1745
    %v1752 = vsub.f32 %v1698, %v1751
    %v1754 = vperm.slane %v1752, 0
    %v1756 = vadd.f32 %v1747, %v1754
    %v1757 = vadd.f32 %v1748, %v1754
    %v1758 = vadd.f32 %v1749, %v1754
    %v1759 = vadd.f32 %v1750, %v1754
    %1760 = vst [vmem:[#allocation10] sm:$0xff] %v1756
    %1761 = vst [vmem:[#allocation10 + $0x8] sm:$0xff] %v1757
    %1762 = vst [vmem:[#allocation10 + $0x10] sm:$0xff] %v1758
    %1763 = vst [vmem:[#allocation10 + $0x18] sm:$0xff] %v1759
    // Predicated region
    $region50: #{tpu_custom_call.1} parent=1 // pred_check
      _
    $region51: #{tpu_custom_call.1} parent=1 // pred_check_branch
      %1765 = sbr.rel (0) target = $region53
    $region52: #{tpu_custom_call.1} parent=1 // pred_region
      %1767 = vsyncadd [#allocation4], 0
      %s1768 = sshll.u32 [#allocation10], 4
      %s1769 = int_to_ptr.vmem [resolvable:$true] %s1768
      %s1770 = sshll.u32 %s8, 4
      %s1771 = int_to_ptr.hbm [resolvable:$true] %s1770
      %1776 = dma.vmem_to_hbm [thread:$0]  %s1769, 512, %s1771, [#allocation4], 128, 128, 8
    $region53: #{tpu_custom_call.1} parent=1 // pred_fallthru
      _
    // Predicated region
    $region54: #{tpu_custom_call.1} parent=1 // pred_check
      _
    $region55: #{tpu_custom_call.1} parent=1 // pred_check_branch
      %1778 = sbr.rel (0) target = $region57
    $region56: #{tpu_custom_call.1} parent=1 // pred_region
      %1780 = dma.done [#allocation4], 512
    $region57: #{tpu_custom_call.1} parent=1 // pred_fallthru
      _
    %1781 = vsyncpa [#allocation3], 1
    %1782 = vsyncpa [#allocation6], 1
    %1783 = vsyncpa [#allocation9], 1
    %1784 = vsyncpa [#allocation4], 1

</llo_original>
